<compile_context>
chip_gen: v7x
topology: tpu7x:2x2x1
jax: 0.10.0
libtpu: 0.0.40
codegen_flags: <defaults>
</compile_context>

<pallas_src>
import functools
import math

import jax
import jax.numpy as jnp
from jax.experimental import pallas as pl
from jax.experimental.pallas import tpu as pltpu


# ----------------------------------------------------------------------------
# In-kernel math helpers (fp32)
# ----------------------------------------------------------------------------
def _ln(x, g, b, eps):
    """LayerNorm over the last axis (matches nn.LayerNorm, eps=1e-12)."""
    mu = jnp.mean(x, axis=-1, keepdims=True)
    var = jnp.mean(jnp.square(x - mu), axis=-1, keepdims=True)
    return (x - mu) * jax.lax.rsqrt(var + eps) * g + b


def _erf(x):
    # lax.erf has no Mosaic lowering; Abramowitz & Stegun 7.1.26 rational
    # approximation (|err| <= 1.5e-7).  The reciprocal goes to the EUP slot.
    a1, a2, a3, a4, a5 = 0.254829592, -0.284496736, 1.421413741, -1.453152027, 1.061405429
    p = 0.3275911
    sgn = jnp.where(x >= 0.0, 1.0, -1.0)
    ax = jnp.abs(x)
    t = pl.reciprocal(1.0 + p * ax, approx=True)
    poly = ((((a5 * t + a4) * t + a3) * t + a2) * t + a1) * t
    return sgn * (1.0 - poly * jnp.exp(-ax * ax))


def _gelu_exact(x):
    return 0.5 * x * (1.0 + _erf(x * (1.0 / math.sqrt(2.0))))


# ----------------------------------------------------------------------------
# Tiling / VMEM helpers
# ----------------------------------------------------------------------------
def _pick_tile(n, cap):
    """Largest divisor of n that is a multiple of 8 and <= cap; else n (full)."""
    if n <= cap:
        return n
    for t in range(cap, 7, -1):
        if n % t == 0 and t % 8 == 0:
            return t
    return n


def _pick_lane_tile(n, cap):
    """Largest divisor of n that is a multiple of 128 and <= cap; else n."""
    if n <= cap:
        return n
    start = (cap // 128) * 128
    for t in range(start, 127, -128):
        if n % t == 0:
            return t
    return n


@functools.lru_cache(maxsize=None)
def _vmem_cap_bytes():
    try:
        info = pltpu.get_tpu_info()
        cap = getattr(info, "vmem_capacity_bytes", None)
        if cap:
            return int(cap)
    except Exception:
        pass
    return 64 * 2 ** 20  # conservative (v7x per-TensorCore)


def _vmem_limit_bytes(request):
    """Clamp a VMEM request to <= ~85% of physical capacity (headroom on v7x)."""
    hi = int(_vmem_cap_bytes() * 0.85)
    lo = min(hi, 32 * 2 ** 20)
    return int(max(lo, min(int(request), hi)))


# ----------------------------------------------------------------------------
# pl.Buffered(1) capability probe (single-buffer constant weight blocks)
# ----------------------------------------------------------------------------
_BUFFERED_ONE_OK = None


def _probe_buffered_one():
    try:
        def _k(x_ref, w_ref, o_ref):
            o_ref[...] = x_ref[...] + w_ref[...]

        x = jnp.arange(16 * 128, dtype=jnp.float32).reshape(16, 128)
        w = jnp.ones((8, 128), jnp.float32)
        out = pl.pallas_call(
            _k,
            grid=(2,),
            in_specs=[
                pl.BlockSpec((8, 128), lambda i: (i, 0)),
                pl.BlockSpec((8, 128), lambda i: (0, 0), pipeline_mode=pl.Buffered(1)),
            ],
            out_specs=pl.BlockSpec((8, 128), lambda i: (i, 0)),
            out_shape=jax.ShapeDtypeStruct((16, 128), jnp.float32),
        )(x, w)
        out = jax.block_until_ready(out)
        return bool(jnp.allclose(out, x + 1.0))
    except Exception:
        return False


def _use_buffered_one():
    global _BUFFERED_ONE_OK
    if _BUFFERED_ONE_OK is None:
        _BUFFERED_ONE_OK = _probe_buffered_one()
    return _BUFFERED_ONE_OK


def _const_spec(shape, grid_rank):
    """BlockSpec for a grid-invariant operand (weights / biases / LN params)."""
    nd = len(shape)
    if grid_rank == 1:
        idx = lambda i, _n=nd: (0,) * _n
    else:
        idx = lambda i, j, _n=nd: (0,) * _n
    if _use_buffered_one():
        return pl.BlockSpec(shape, idx, pipeline_mode=pl.Buffered(1))
    return pl.BlockSpec(shape, idx)


# ----------------------------------------------------------------------------
# Kernel 1: fused embedding add + LayerNorm   grid = (batch, seq_tiles)
# ----------------------------------------------------------------------------
def emb_ln_kernel(we_ref, pe_ref, te_ref, g_ref, b_ref, o_ref, *, eps):
    x = we_ref[0].astype(jnp.float32) + pe_ref[...] + te_ref[...]
    o_ref[0] = _ln(x, g_ref[...], b_ref[...], eps).astype(o_ref.dtype)


def embed_layernorm(we, pe, te, gamma, beta, eps=1e-12):
    b, s, h = we.shape
    tr = _pick_tile(s, 512)
    grid = (b, s // tr)
    return pl.pallas_call(
        functools.partial(emb_ln_kernel, eps=eps),
        grid=grid,
        in_specs=[
            pl.BlockSpec((1, tr, h), lambda bi, si: (bi, si, 0)),
            pl.BlockSpec((tr, h), lambda bi, si: (si, 0)),
            _const_spec((1, h), 2),
            _const_spec((1, h), 2),
            _const_spec((1, h), 2),
        ],
        out_specs=pl.BlockSpec((1, tr, h), lambda bi, si: (bi, si, 0)),
        out_shape=jax.ShapeDtypeStruct((b, s, h), jnp.bfloat16),
        compiler_params=pltpu.CompilerParams(
            dimension_semantics=("parallel", "parallel")),
    )(we, pe, te, gamma, beta)


# ----------------------------------------------------------------------------
# Kernel 2: fused QKV projection (packed (H, 3H) bf16 weight), row-tiled
# ----------------------------------------------------------------------------
def qkv_kernel(x_ref, w_ref, b_ref, q_ref, k_ref, v_ref, *, hidden):
    y = jnp.dot(x_ref[...], w_ref[...], preferred_element_type=jnp.float32) + b_ref[...]
    q_ref[...] = y[:, :hidden].astype(q_ref.dtype)
    k_ref[...] = y[:, hidden:2 * hidden].astype(k_ref.dtype)
    v_ref[...] = y[:, 2 * hidden:].astype(v_ref.dtype)


def qkv_proj(x2d, wqkv, bqkv):
    n, h = x2d.shape
    tr = _pick_tile(n, 512)
    row_spec = pl.BlockSpec((tr, h), lambda i: (i, 0))
    out_sd = jax.ShapeDtypeStruct((n, h), jnp.bfloat16)

    w1 = 1 if _use_buffered_one() else 2
    req = (h * 3 * h * 2 * w1          # packed weight (bf16)
           + tr * h * 2 * 2            # x tile (bf16, double-buffered)
           + tr * 3 * h * 4            # fp32 matmul result
           + 3 * tr * h * 2 * 2        # q/k/v output tiles
           + 3 * h * 4 * 2             # bias
           + (4 << 20))
    vmem_limit = _vmem_limit_bytes(int(req * 1.5))

    return pl.pallas_call(
        functools.partial(qkv_kernel, hidden=h),
        grid=(n // tr,),
        in_specs=[row_spec, _const_spec((h, 3 * h), 1), _const_spec((1, 3 * h), 1)],
        out_specs=[row_spec, row_spec, row_spec],
        out_shape=[out_sd, out_sd, out_sd],
        compiler_params=pltpu.CompilerParams(
            dimension_semantics=("parallel",),
            vmem_limit_bytes=vmem_limit),
    )(x2d, wqkv, bqkv)


# ----------------------------------------------------------------------------
# Kernel 3: fused head-batched attention + output proj + LN1 + FFN + LN2
#           grid = (batch, num_query_tiles)
# ----------------------------------------------------------------------------
def attn_ffn_kernel(
    q_ref, k_ref, v_ref, x_ref, mask_ref,
    wo_ref, bo_ref, ln1g_ref, ln1b_ref,
    wi_ref, bi_ref, wo2_ref, bo2_ref, ln2g_ref, ln2b_ref,
    o_ref, *, eps,
):
    q = q_ref[0]                                   # (nH, TQ, hd) bf16
    k = k_ref[0]                                   # (nH, S,  hd) bf16
    v = v_ref[0]                                   # (nH, S,  hd) bf16
    xres = x_ref[0].astype(jnp.float32)            # (TQ, H) residual
    mask = mask_ref[0].astype(jnp.float32)         # (1, S) additive mask

    num_heads, _, head_dim = q.shape
    scale = 1.0 / math.sqrt(head_dim)              # power of 2 for hd in {16,64,256}
    q = q * scale

    # Batched (over heads) QK^T and PV matmuls; mask added once to the full
    # score tensor (no per-head broadcast / lane slicing).
    scores = jnp.einsum("hqd,hkd->hqk", q, k,
                        preferred_element_type=jnp.float32)         # (nH,TQ,S)
    scores = scores + mask
    scores = scores - jnp.max(scores, axis=-1, keepdims=True)
    probs = jnp.exp(scores)
    probs = probs * pl.reciprocal(jnp.sum(probs, axis=-1, keepdims=True), approx=True)
    ctx = jnp.einsum("hqk,hkd->hqd", probs.astype(jnp.bfloat16), v,
                     preferred_element_type=jnp.float32)            # (nH,TQ,hd)

    # Attention output projection: accumulate per head against wo reshaped to
    # (nH, hd, H) -- leading-dim indexing only, output stays (TQ, H) lane-dense.
    attn = jnp.zeros(xres.shape, jnp.float32)
    for hh in range(num_heads):
        attn = attn + jnp.dot(ctx[hh].astype(jnp.bfloat16), wo_ref[hh],
                              preferred_element_type=jnp.float32)
    attn = attn + bo_ref[...]

    x1 = _ln(attn + xres, ln1g_ref[...], ln1b_ref[...], eps)

    inter = jnp.dot(x1.astype(jnp.bfloat16), wi_ref[...],
                    preferred_element_type=jnp.float32) + bi_ref[...]
    inter = _gelu_exact(inter)
    ffn = jnp.dot(inter.astype(jnp.bfloat16), wo2_ref[...],
                  preferred_element_type=jnp.float32) + bo2_ref[...]
    x2 = _ln(ffn + x1, ln2g_ref[...], ln2b_ref[...], eps)

    o_ref[0] = x2.astype(o_ref.dtype)


def attn_ffn_layer(x, q, k, v, mask_add, p, *, num_heads, eps=1e-12):
    b, s, h = x.shape
    hd = h // num_heads
    inter = p["wi"].shape[1]
    tq = _pick_tile(s, 128)                 # 128: fits v7x VMEM, feeds both cores
    grid = (b, s // tq)

    wo_r = p["wo"].reshape(num_heads, hd, h)   # (H,H) -> (nH, hd, H), free reshape

    q_spec = pl.BlockSpec((1, num_heads, tq, hd), lambda bi, qi: (bi, 0, qi, 0))
    kv_spec = pl.BlockSpec((1, num_heads, s, hd), lambda bi, qi: (bi, 0, 0, 0))
    x_spec = pl.BlockSpec((1, tq, h), lambda bi, qi: (bi, qi, 0))
    mask_spec = pl.BlockSpec((1, 1, s), lambda bi, qi: (bi, 0, 0))

    in_specs = [
        q_spec, kv_spec, kv_spec, x_spec, mask_spec,
        _const_spec((num_heads, hd, h), 2), _const_spec((1, h), 2),     # wo_r, bo
        _const_spec((1, h), 2), _const_spec((1, h), 2),                 # ln1 g/b
        _const_spec((h, inter), 2), _const_spec((1, inter), 2),         # wi, bi
        _const_spec((inter, h), 2), _const_spec((1, h), 2),             # wo2, bo2
        _const_spec((1, h), 2), _const_spec((1, h), 2),                 # ln2 g/b
    ]

    w1 = 1 if _use_buffered_one() else 2
    req = ((h * h + 2 * h * inter) * 2 * w1      # bf16 weights
           + 4 * s * h * 2                       # K+V blocks (double-buffered bf16)
           + 8 * tq * h * 2                      # q / x / out blocks
           + 3 * num_heads * tq * s * 4          # fp32 score/prob temporaries
           + 3 * tq * inter * 4                  # FFN intermediate + GELU temps
           + (8 << 20))
    vmem_limit = _vmem_limit_bytes(int(req * 1.5))

    return pl.pallas_call(
        functools.partial(attn_ffn_kernel, eps=eps),
        grid=grid,
        in_specs=in_specs,
        out_specs=pl.BlockSpec((1, tq, h), lambda bi, qi: (bi, qi, 0)),
        out_shape=jax.ShapeDtypeStruct((b, s, h), jnp.bfloat16),
        compiler_params=pltpu.CompilerParams(
            dimension_semantics=("parallel", "parallel"),
            vmem_limit_bytes=vmem_limit),
    )(
        q, k, v, x, mask_add,
        wo_r, p["bo"], p["ln1_g"], p["ln1_b"],
        p["wi"], p["bi"], p["wo2"], p["bo2"], p["ln2_g"], p["ln2_b"],
    )


# ----------------------------------------------------------------------------
# Kernel 4: final projection  out = x @ Wp + bp
#           grid = (out_tiles, row_tiles)  -- weight streamed once over columns
# ----------------------------------------------------------------------------
def linear_kernel(x_ref, w_ref, b_ref, o_ref):
    y = jnp.dot(x_ref[...], w_ref[...], preferred_element_type=jnp.float32) + b_ref[...]
    o_ref[...] = y.astype(o_ref.dtype)


def linear(x, w, b):
    n, h = x.shape
    o = w.shape[1]                       # already padded to a multiple of 128
    tr = _pick_tile(n, 512)
    to = _pick_lane_tile(o, 2048)
    grid = (o // to, n // tr)

    req = (h * to * 2 * 2                # weight tile (bf16, double-buffered)
           + tr * h * 2 * 2              # x tile
           + 3 * tr * to * 4             # fp32 result + out tile
           + to * 4 * 2
           + (4 << 20))
    vmem_limit = _vmem_limit_bytes(int(req * 1.5))

    return pl.pallas_call(
        linear_kernel,
        grid=grid,
        in_specs=[
            pl.BlockSpec((tr, h), lambda j, i: (i, 0)),
            pl.BlockSpec((h, to), lambda j, i: (0, j)),
            pl.BlockSpec((1, to), lambda j, i: (0, j)),
        ],
        out_specs=pl.BlockSpec((tr, to), lambda j, i: (i, j)),
        out_shape=jax.ShapeDtypeStruct((n, o), jnp.float32),
        compiler_params=pltpu.CompilerParams(
            dimension_semantics=("parallel", "parallel"),
            vmem_limit_bytes=vmem_limit),
    )(x, w, b)


# ----------------------------------------------------------------------------
# Model: parameters + forward
# ----------------------------------------------------------------------------
def init_params(key, *, output_size, hidden, num_layers, intermediate, max_pos):
    keys = jax.random.split(key, 4 + num_layers)

    def dense(k, fi, fo):
        kw, kb = jax.random.split(k)
        w = (jax.random.normal(kw, (fi, fo), jnp.float32) * 0.02).astype(jnp.bfloat16)
        bvec = jax.random.normal(kb, (1, fo), jnp.float32) * 0.02
        return w, bvec

    params = {
        # resize_token_embeddings(output_size) -> word table has output_size rows.
        "word_emb": jax.random.normal(keys[0], (output_size, hidden), jnp.float32) * 0.02,
        "pos_emb": jax.random.normal(keys[1], (max_pos, hidden), jnp.float32) * 0.02,
        "tok_type_emb": jax.random.normal(keys[2], (2, hidden), jnp.float32) * 0.02,
        "emb_ln_g": jnp.ones((1, hidden), jnp.float32),
        "emb_ln_b": jnp.zeros((1, hidden), jnp.float32),
        "layers": [],
    }
    for li in range(num_layers):
        lk = jax.random.split(keys[3 + li], 4)
        wqkv, bqkv = dense(lk[0], hidden, 3 * hidden)      # packed Q|K|V
        wo, bo = dense(lk[1], hidden, hidden)
        wi, bi = dense(lk[2], hidden, intermediate)
        wo2, bo2 = dense(lk[3], intermediate, hidden)
        params["layers"].append(dict(
            wqkv=wqkv, bqkv=bqkv, wo=wo, bo=bo,
            ln1_g=jnp.ones((1, hidden), jnp.float32),
            ln1_b=jnp.zeros((1, hidden), jnp.float32),
            wi=wi, bi=bi, wo2=wo2, bo2=bo2,
            ln2_g=jnp.ones((1, hidden), jnp.float32),
            ln2_b=jnp.zeros((1, hidden), jnp.float32),
        ))

    # Final projection: pad the vocab dim to a multiple of 128 lanes (the
    # padding is sliced off after the kernel).
    o_pad = ((output_size + 127) // 128) * 128
    kw, kb = jax.random.split(keys[3 + num_layers])
    pw = jax.random.normal(kw, (hidden, output_size), jnp.float32) * 0.02
    pb = jax.random.normal(kb, (1, output_size), jnp.float32) * 0.02
    params["proj_w"] = jnp.pad(pw, ((0, 0), (0, o_pad - output_size))).astype(jnp.bfloat16)
    params["proj_b"] = jnp.pad(pb, ((0, 0), (0, o_pad - output_size)))
    return params


def lemma_bert_forward(params, input_ids, attention_mask, *, num_heads):
    b, s = input_ids.shape
    output_size, hidden = params["word_emb"].shape
    head_dim = hidden // num_heads

    # ---- embeddings: gather is plain-JAX glue; add + LayerNorm fused in-kernel
    we = jnp.take(params["word_emb"], input_ids, axis=0)      # (B,S,H) fp32
    pe = params["pos_emb"][:s]                                # (S,H)
    te = params["tok_type_emb"][0:1]                          # token_type_ids = 0
    x = embed_layernorm(we, pe, te, params["emb_ln_g"], params["emb_ln_b"])  # bf16
    # dropout: eval mode -> identity

    # ---- extended attention mask: (1 - mask) * finfo.min, shape (B,1,S)
    if attention_mask is None:
        attention_mask = jnp.ones((b, s), jnp.int32)
    mask_add = (1.0 - attention_mask.astype(jnp.float32)) * jnp.finfo(jnp.float32).min
    mask_add = mask_add[:, None, :]

    # ---- encoder layers
    for p in params["layers"]:
        q2, k2, v2 = qkv_proj(x.reshape(b * s, hidden), p["wqkv"], p["bqkv"])

        def to_heads(t):
            return t.reshape(b, s, num_heads, head_dim).transpose(0, 2, 1, 3)

        x = attn_ffn_layer(x, to_heads(q2), to_heads(k2), to_heads(v2),
                           mask_add, p, num_heads=num_heads)

    # ---- final projection (output-dim tiled, lane-padded)
    out = linear(x.reshape(b * s, hidden), params["proj_w"], params["proj_b"])
    return out[:, :output_size].reshape(b, s, output_size)


# ----------------------------------------------------------------------------
if __name__ == "__main__":
    OUTPUT_SIZE = 48        # projection size == resized token-embedding rows
    HIDDEN = 32
    NUM_LAYERS = 2
    NUM_HEADS = 2
    INTERMEDIATE = 64
    B, S = 2, 8
    MAX_POS = 16

    # Run the Buffered(1) capability probe eagerly (outside of any jit trace).
    _use_buffered_one()

    key = jax.random.PRNGKey(0)
    pkey, ikey = jax.random.split(key)
    params = init_params(pkey, output_size=OUTPUT_SIZE, hidden=HIDDEN,
                         num_layers=NUM_LAYERS, intermediate=INTERMEDIATE,
                         max_pos=MAX_POS)

    input_ids = jax.random.randint(ikey, (B, S), 0, OUTPUT_SIZE, dtype=jnp.int32)
    attention_mask = jnp.ones((B, S), jnp.int32).at[1, 6:].set(0)  # pad tail of row 1

    fwd = jax.jit(functools.partial(lemma_bert_forward, num_heads=NUM_HEADS))
    out = jax.block_until_ready(fwd(params, input_ids, attention_mask))

    assert out.shape == (B, S, OUTPUT_SIZE), out.shape
    assert bool(jnp.all(jnp.isfinite(out)))
    print("KERNEL_OK")
</pallas_src>

<mosaic_0001>
module attributes {stable_mosaic.version = 11 : i64} {
  func.func @_k(%arg0: i32, %arg1: memref<8x128xf32, #tpu.memory_space<vmem>>, %arg2: memref<8x128xf32, #tpu.memory_space<vmem>>, %arg3: memref<8x128xf32, #tpu.memory_space<vmem>>) attributes {dimension_semantics = [#tpu.dimension_semantics<arbitrary>], iteration_bounds = array<i64: 2>, scalar_prefetch = 0 : i64, scratch_operands = 0 : i64, tpu.core_type = #tpu.core_type<tc>, window_params = [{transform_indices = @transform_0, window_bounds = array<i64: 8, 128>}, {pipeline_mode = #tpu.pipeline_mode<synchronous>, transform_indices = @transform_1, window_bounds = array<i64: 8, 128>}, {transform_indices = @transform_2, window_bounds = array<i64: 8, 128>}]} {
    %c0 = arith.constant 0 : index
    %c0_0 = arith.constant 0 : index
    %0 = vector.load %arg1[%c0, %c0_0] : memref<8x128xf32, #tpu.memory_space<vmem>>, vector<8x128xf32>
    %c0_1 = arith.constant 0 : index
    %c0_2 = arith.constant 0 : index
    %1 = vector.load %arg2[%c0_1, %c0_2] : memref<8x128xf32, #tpu.memory_space<vmem>>, vector<8x128xf32>
    %2 = arith.addf %0, %1 : vector<8x128xf32>
    %c0_3 = arith.constant 0 : index
    %c0_4 = arith.constant 0 : index
    %3 = vector.load %arg3[%c0_3, %c0_4] : memref<8x128xf32, #tpu.memory_space<vmem>>, vector<8x128xf32>
    tpu.vector_store %arg3[%c0_3, %c0_4], %2 {strides = array<i32>} : memref<8x128xf32, #tpu.memory_space<vmem>>, vector<8x128xf32>,
    return
  }
  func.func @transform_0(%arg0: i32) -> (i32, i32) {
    %c0_i32 = arith.constant 0 : i32
    %c0_i32_0 = arith.constant 0 : i32
    return %arg0, %c0_i32 : i32, i32
  }
  func.func @transform_1(%arg0: i32) -> (i32, i32) {
    %c0_i32 = arith.constant 0 : i32
    %c0_i32_0 = arith.constant 0 : i32
    %c0_i32_1 = arith.constant 0 : i32
    return %c0_i32, %c0_i32_0 : i32, i32
  }
  func.func @transform_2(%arg0: i32) -> (i32, i32) {
    %c0_i32 = arith.constant 0 : i32
    %c0_i32_0 = arith.constant 0 : i32
    return %arg0, %c0_i32 : i32, i32
  }
}

module attributes {stable_mosaic.version = 11 : i64} {
  func.func @emb_ln_kernel(%arg0: i32, %arg1: i32, %arg2: memref<1x8x32xf32, #tpu.memory_space<vmem>>, %arg3: memref<8x32xf32, #tpu.memory_space<vmem>>, %arg4: memref<1x32xf32, #tpu.memory_space<vmem>>, %arg5: memref<1x32xf32, #tpu.memory_space<vmem>>, %arg6: memref<1x32xf32, #tpu.memory_space<vmem>>, %arg7: memref<1x8x32xbf16, #tpu.memory_space<vmem>>) attributes {dimension_semantics = [#tpu.dimension_semantics<parallel>, #tpu.dimension_semantics<parallel>], iteration_bounds = array<i64: 2, 1>, scalar_prefetch = 0 : i64, scratch_operands = 0 : i64, tpu.core_type = #tpu.core_type<tc>, window_params = [{transform_indices = @transform_0, window_bounds = array<i64: 1, 8, 32>}, {transform_indices = @transform_1, window_bounds = array<i64: 8, 32>}, {pipeline_mode = #tpu.pipeline_mode<synchronous>, transform_indices = @transform_2, window_bounds = array<i64: 1, 32>}, {pipeline_mode = #tpu.pipeline_mode<synchronous>, transform_indices = @transform_3, window_bounds = array<i64: 1, 32>}, {pipeline_mode = #tpu.pipeline_mode<synchronous>, transform_indices = @transform_4, window_bounds = array<i64: 1, 32>}, {transform_indices = @transform_5, window_bounds = array<i64: 1, 8, 32>}]} {
    %c0 = arith.constant 0 : index
    %c0_0 = arith.constant 0 : index
    %c0_1 = arith.constant 0 : index
    %0 = vector.load %arg2[%c0, %c0_0, %c0_1] : memref<1x8x32xf32, #tpu.memory_space<vmem>>, vector<1x8x32xf32>
    %1 = vector.shape_cast %0 : vector<1x8x32xf32> to vector<8x32xf32>
    %c0_2 = arith.constant 0 : index
    %c0_3 = arith.constant 0 : index
    %2 = vector.load %arg3[%c0_2, %c0_3] : memref<8x32xf32, #tpu.memory_space<vmem>>, vector<8x32xf32>
    %3 = arith.addf %1, %2 : vector<8x32xf32>
    %c0_4 = arith.constant 0 : index
    %c0_5 = arith.constant 0 : index
    %4 = vector.load %arg4[%c0_4, %c0_5] : memref<1x32xf32, #tpu.memory_space<vmem>>, vector<1x32xf32>
    %5 = vector.broadcast %4 : vector<1x32xf32> to vector<8x32xf32>
    %6 = arith.addf %3, %5 : vector<8x32xf32>
    %c0_6 = arith.constant 0 : index
    %c0_7 = arith.constant 0 : index
    %7 = vector.load %arg5[%c0_6, %c0_7] : memref<1x32xf32, #tpu.memory_space<vmem>>, vector<1x32xf32>
    %c0_8 = arith.constant 0 : index
    %c0_9 = arith.constant 0 : index
    %8 = vector.load %arg6[%c0_8, %c0_9] : memref<1x32xf32, #tpu.memory_space<vmem>>, vector<1x32xf32>
    %cst = arith.constant dense<0.000000e+00> : vector<8xf32>
    %9 = vector.multi_reduction <add>, %6, %cst [1] : vector<8x32xf32> to vector<8xf32>
    %10 = vector.shape_cast %9 : vector<8xf32> to vector<8x1xf32>
    %cst_10 = arith.constant 3.200000e+01 : f32
    %11 = vector.broadcast %cst_10 : f32 to vector<8x1xf32>
    %12 = arith.divf %10, %11 : vector<8x1xf32>
    %13 = vector.broadcast %12 : vector<8x1xf32> to vector<8x32xf32>
    %14 = arith.subf %6, %13 : vector<8x32xf32>
    %15 = arith.mulf %14, %14 : vector<8x32xf32>
    %cst_11 = arith.constant dense<0.000000e+00> : vector<8xf32>
    %16 = vector.multi_reduction <add>, %15, %cst_11 [1] : vector<8x32xf32> to vector<8xf32>
    %17 = vector.shape_cast %16 : vector<8xf32> to vector<8x1xf32>
    %cst_12 = arith.constant 3.200000e+01 : f32
    %18 = vector.broadcast %cst_12 : f32 to vector<8x1xf32>
    %19 = arith.divf %17, %18 : vector<8x1xf32>
    %20 = vector.broadcast %12 : vector<8x1xf32> to vector<8x32xf32>
    %21 = arith.subf %6, %20 : vector<8x32xf32>
    %cst_13 = arith.constant 9.99999996E-13 : f32
    %22 = vector.broadcast %cst_13 : f32 to vector<8x1xf32>
    %23 = arith.addf %19, %22 : vector<8x1xf32>
    %24 = math.rsqrt %23 : vector<8x1xf32>
    %25 = vector.broadcast %24 : vector<8x1xf32> to vector<8x32xf32>
    %26 = arith.mulf %21, %25 : vector<8x32xf32>
    %27 = vector.broadcast %7 : vector<1x32xf32> to vector<8x32xf32>
    %28 = arith.mulf %26, %27 : vector<8x32xf32>
    %29 = vector.broadcast %8 : vector<1x32xf32> to vector<8x32xf32>
    %30 = arith.addf %28, %29 : vector<8x32xf32>
    %31 = arith.truncf %30 : vector<8x32xf32> to vector<8x32xbf16>
    %c0_14 = arith.constant 0 : index
    %c0_15 = arith.constant 0 : index
    %c0_16 = arith.constant 0 : index
    %32 = vector.load %arg7[%c0_14, %c0_15, %c0_16] : memref<1x8x32xbf16, #tpu.memory_space<vmem>>, vector<1x8x32xbf16>
    %33 = vector.shape_cast %32 : vector<1x8x32xbf16> to vector<8x32xbf16>
    %34 = vector.shape_cast %31 : vector<8x32xbf16> to vector<1x8x32xbf16>
    tpu.vector_store %arg7[%c0_14, %c0_15, %c0_16], %34 {strides = array<i32>} : memref<1x8x32xbf16, #tpu.memory_space<vmem>>, vector<1x8x32xbf16>,
    return
  }
  func.func @transform_0(%arg0: i32, %arg1: i32) -> (i32, i32, i32) {
    %c0_i32 = arith.constant 0 : i32
    %c0_i32_0 = arith.constant 0 : i32
    return %arg0, %arg1, %c0_i32 : i32, i32, i32
  }
  func.func @transform_1(%arg0: i32, %arg1: i32) -> (i32, i32) {
    %c0_i32 = arith.constant 0 : i32
    %c0_i32_0 = arith.constant 0 : i32
    return %arg1, %c0_i32 : i32, i32
  }
  func.func @transform_2(%arg0: i32, %arg1: i32) -> (i32, i32) {
    %c0_i32 = arith.constant 0 : i32
    %c0_i32_0 = arith.constant 0 : i32
    %c0_i32_1 = arith.constant 0 : i32
    return %c0_i32, %c0_i32_0 : i32, i32
  }
  func.func @transform_3(%arg0: i32, %arg1: i32) -> (i32, i32) {
    %c0_i32 = arith.constant 0 : i32
    %c0_i32_0 = arith.constant 0 : i32
    %c0_i32_1 = arith.constant 0 : i32
    return %c0_i32, %c0_i32_0 : i32, i32
  }
  func.func @transform_4(%arg0: i32, %arg1: i32) -> (i32, i32) {
    %c0_i32 = arith.constant 0 : i32
    %c0_i32_0 = arith.constant 0 : i32
    %c0_i32_1 = arith.constant 0 : i32
    return %c0_i32, %c0_i32_0 : i32, i32
  }
  func.func @transform_5(%arg0: i32, %arg1: i32) -> (i32, i32, i32) {
    %c0_i32 = arith.constant 0 : i32
    %c0_i32_0 = arith.constant 0 : i32
    return %arg0, %arg1, %c0_i32 : i32, i32, i32
  }
}

module attributes {stable_mosaic.version = 11 : i64} {
  func.func @qkv_kernel(%arg0: i32, %arg1: memref<16x32xbf16, #tpu.memory_space<vmem>>, %arg2: memref<32x96xbf16, #tpu.memory_space<vmem>>, %arg3: memref<1x96xf32, #tpu.memory_space<vmem>>, %arg4: memref<16x32xbf16, #tpu.memory_space<vmem>>, %arg5: memref<16x32xbf16, #tpu.memory_space<vmem>>, %arg6: memref<16x32xbf16, #tpu.memory_space<vmem>>) attributes {dimension_semantics = [#tpu.dimension_semantics<parallel>], iteration_bounds = array<i64: 1>, scalar_prefetch = 0 : i64, scratch_operands = 0 : i64, tpu.core_type = #tpu.core_type<tc>, window_params = [{transform_indices = @transform_0, window_bounds = array<i64: 16, 32>}, {pipeline_mode = #tpu.pipeline_mode<synchronous>, transform_indices = @transform_1, window_bounds = array<i64: 32, 96>}, {pipeline_mode = #tpu.pipeline_mode<synchronous>, transform_indices = @transform_2, window_bounds = array<i64: 1, 96>}, {transform_indices = @transform_3, window_bounds = array<i64: 16, 32>}, {transform_indices = @transform_4, window_bounds = array<i64: 16, 32>}, {transform_indices = @transform_5, window_bounds = array<i64: 16, 32>}]} {
    %c0 = arith.constant 0 : index
    %c0_0 = arith.constant 0 : index
    %0 = vector.load %arg1[%c0, %c0_0] : memref<16x32xbf16, #tpu.memory_space<vmem>>, vector<16x32xbf16>
    %c0_1 = arith.constant 0 : index
    %c0_2 = arith.constant 0 : index
    %1 = vector.load %arg2[%c0_1, %c0_2] : memref<32x96xbf16, #tpu.memory_space<vmem>>, vector<32x96xbf16>
    %cst = arith.constant dense<0.000000e+00> : vector<16x96xf32>
    %2 = tpu.matmul %0, %1, %cst {dimension_numbers = #tpu.dot_dimension_numbers<[1], [0], [0], [1], [0, 0, 1, 1], [], []>} : vector<16x32xbf16>, vector<32x96xbf16>, vector<16x96xf32> -> vector<16x96xf32>
    %c0_3 = arith.constant 0 : index
    %c0_4 = arith.constant 0 : index
    %3 = vector.load %arg3[%c0_3, %c0_4] : memref<1x96xf32, #tpu.memory_space<vmem>>, vector<1x96xf32>
    %4 = vector.broadcast %3 : vector<1x96xf32> to vector<16x96xf32>
    %5 = arith.addf %2, %4 : vector<16x96xf32>
    %6 = vector.extract_strided_slice %5 {offsets = [0, 0], sizes = [16, 32], strides = [1, 1]} : vector<16x96xf32> to vector<16x32xf32>
    %7 = arith.truncf %6 : vector<16x32xf32> to vector<16x32xbf16>
    %c0_5 = arith.constant 0 : index
    %c0_6 = arith.constant 0 : index
    %8 = vector.load %arg4[%c0_5, %c0_6] : memref<16x32xbf16, #tpu.memory_space<vmem>>, vector<16x32xbf16>
    tpu.vector_store %arg4[%c0_5, %c0_6], %7 {strides = array<i32>} : memref<16x32xbf16, #tpu.memory_space<vmem>>, vector<16x32xbf16>,
    %9 = vector.extract_strided_slice %5 {offsets = [0, 32], sizes = [16, 32], strides = [1, 1]} : vector<16x96xf32> to vector<16x32xf32>
    %10 = arith.truncf %9 : vector<16x32xf32> to vector<16x32xbf16>
    %c0_7 = arith.constant 0 : index
    %c0_8 = arith.constant 0 : index
    %11 = vector.load %arg5[%c0_7, %c0_8] : memref<16x32xbf16, #tpu.memory_space<vmem>>, vector<16x32xbf16>
    tpu.vector_store %arg5[%c0_7, %c0_8], %10 {strides = array<i32>} : memref<16x32xbf16, #tpu.memory_space<vmem>>, vector<16x32xbf16>,
    %12 = vector.extract_strided_slice %5 {offsets = [0, 64], sizes = [16, 32], strides = [1, 1]} : vector<16x96xf32> to vector<16x32xf32>
    %13 = arith.truncf %12 : vector<16x32xf32> to vector<16x32xbf16>
    %c0_9 = arith.constant 0 : index
    %c0_10 = arith.constant 0 : index
    %14 = vector.load %arg6[%c0_9, %c0_10] : memref<16x32xbf16, #tpu.memory_space<vmem>>, vector<16x32xbf16>
    tpu.vector_store %arg6[%c0_9, %c0_10], %13 {strides = array<i32>} : memref<16x32xbf16, #tpu.memory_space<vmem>>, vector<16x32xbf16>,
    return
  }
  func.func @transform_0(%arg0: i32) -> (i32, i32) {
    %c0_i32 = arith.constant 0 : i32
    %c0_i32_0 = arith.constant 0 : i32
    return %arg0, %c0_i32 : i32, i32
  }
  func.func @transform_1(%arg0: i32) -> (i32, i32) {
    %c0_i32 = arith.constant 0 : i32
    %c0_i32_0 = arith.constant 0 : i32
    %c0_i32_1 = arith.constant 0 : i32
    return %c0_i32, %c0_i32_0 : i32, i32
  }
  func.func @transform_2(%arg0: i32) -> (i32, i32) {
    %c0_i32 = arith.constant 0 : i32
    %c0_i32_0 = arith.constant 0 : i32
    %c0_i32_1 = arith.constant 0 : i32
    return %c0_i32, %c0_i32_0 : i32, i32
  }
  func.func @transform_3(%arg0: i32) -> (i32, i32) {
    %c0_i32 = arith.constant 0 : i32
    %c0_i32_0 = arith.constant 0 : i32
    return %arg0, %c0_i32 : i32, i32
  }
  func.func @transform_4(%arg0: i32) -> (i32, i32) {
    %c0_i32 = arith.constant 0 : i32
    %c0_i32_0 = arith.constant 0 : i32
    return %arg0, %c0_i32 : i32, i32
  }
  func.func @transform_5(%arg0: i32) -> (i32, i32) {
    %c0_i32 = arith.constant 0 : i32
    %c0_i32_0 = arith.constant 0 : i32
    return %arg0, %c0_i32 : i32, i32
  }
}

module attributes {stable_mosaic.version = 11 : i64} {
  func.func @linear_kernel(%arg0: i32, %arg1: i32, %arg2: memref<16x32xbf16, #tpu.memory_space<vmem>>, %arg3: memref<32x128xbf16, #tpu.memory_space<vmem>>, %arg4: memref<1x128xf32, #tpu.memory_space<vmem>>, %arg5: memref<16x128xf32, #tpu.memory_space<vmem>>) attributes {dimension_semantics = [#tpu.dimension_semantics<parallel>, #tpu.dimension_semantics<parallel>], iteration_bounds = array<i64: 1, 1>, scalar_prefetch = 0 : i64, scratch_operands = 0 : i64, tpu.core_type = #tpu.core_type<tc>, window_params = [{transform_indices = @transform_0, window_bounds = array<i64: 16, 32>}, {transform_indices = @transform_1, window_bounds = array<i64: 32, 128>}, {transform_indices = @transform_2, window_bounds = array<i64: 1, 128>}, {transform_indices = @transform_3, window_bounds = array<i64: 16, 128>}]} {
    %c0 = arith.constant 0 : index
    %c0_0 = arith.constant 0 : index
    %0 = vector.load %arg2[%c0, %c0_0] : memref<16x32xbf16, #tpu.memory_space<vmem>>, vector<16x32xbf16>
    %c0_1 = arith.constant 0 : index
    %c0_2 = arith.constant 0 : index
    %1 = vector.load %arg3[%c0_1, %c0_2] : memref<32x128xbf16, #tpu.memory_space<vmem>>, vector<32x128xbf16>
    %cst = arith.constant dense<0.000000e+00> : vector<16x128xf32>
    %2 = tpu.matmul %0, %1, %cst {dimension_numbers = #tpu.dot_dimension_numbers<[1], [0], [0], [1], [0, 0, 1, 1], [], []>} : vector<16x32xbf16>, vector<32x128xbf16>, vector<16x128xf32> -> vector<16x128xf32>
    %c0_3 = arith.constant 0 : index
    %c0_4 = arith.constant 0 : index
    %3 = vector.load %arg4[%c0_3, %c0_4] : memref<1x128xf32, #tpu.memory_space<vmem>>, vector<1x128xf32>
    %4 = vector.broadcast %3 : vector<1x128xf32> to vector<16x128xf32>
    %5 = arith.addf %2, %4 : vector<16x128xf32>
    %c0_5 = arith.constant 0 : index
    %c0_6 = arith.constant 0 : index
    %6 = vector.load %arg5[%c0_5, %c0_6] : memref<16x128xf32, #tpu.memory_space<vmem>>, vector<16x128xf32>
    tpu.vector_store %arg5[%c0_5, %c0_6], %5 {strides = array<i32>} : memref<16x128xf32, #tpu.memory_space<vmem>>, vector<16x128xf32>,
    return
  }
  func.func @transform_0(%arg0: i32, %arg1: i32) -> (i32, i32) {
    %c0_i32 = arith.constant 0 : i32
    %c0_i32_0 = arith.constant 0 : i32
    return %arg1, %c0_i32 : i32, i32
  }
  func.func @transform_1(%arg0: i32, %arg1: i32) -> (i32, i32) {
    %c0_i32 = arith.constant 0 : i32
    %c0_i32_0 = arith.constant 0 : i32
    return %c0_i32, %arg0 : i32, i32
  }
  func.func @transform_2(%arg0: i32, %arg1: i32) -> (i32, i32) {
    %c0_i32 = arith.constant 0 : i32
    %c0_i32_0 = arith.constant 0 : i32
    return %c0_i32, %arg0 : i32, i32
  }
  func.func @transform_3(%arg0: i32, %arg1: i32) -> (i32, i32) {
    %c0_i32 = arith.constant 0 : i32
    return %arg1, %arg0 : i32, i32
  }
}

module attributes {stable_mosaic.version = 11 : i64} {
  func.func @attn_ffn_kernel(%arg0: i32, %arg1: i32, %arg2: memref<1x2x8x16xbf16, #tpu.memory_space<vmem>>, %arg3: memref<1x2x8x16xbf16, #tpu.memory_space<vmem>>, %arg4: memref<1x2x8x16xbf16, #tpu.memory_space<vmem>>, %arg5: memref<1x8x32xbf16, #tpu.memory_space<vmem>>, %arg6: memref<1x1x8xf32, #tpu.memory_space<vmem>>, %arg7: memref<2x16x32xbf16, #tpu.memory_space<vmem>>, %arg8: memref<1x32xf32, #tpu.memory_space<vmem>>, %arg9: memref<1x32xf32, #tpu.memory_space<vmem>>, %arg10: memref<1x32xf32, #tpu.memory_space<vmem>>, %arg11: memref<32x64xbf16, #tpu.memory_space<vmem>>, %arg12: memref<1x64xf32, #tpu.memory_space<vmem>>, %arg13: memref<64x32xbf16, #tpu.memory_space<vmem>>, %arg14: memref<1x32xf32, #tpu.memory_space<vmem>>, %arg15: memref<1x32xf32, #tpu.memory_space<vmem>>, %arg16: memref<1x32xf32, #tpu.memory_space<vmem>>, %arg17: memref<1x8x32xbf16, #tpu.memory_space<vmem>>) attributes {dimension_semantics = [#tpu.dimension_semantics<parallel>, #tpu.dimension_semantics<parallel>], iteration_bounds = array<i64: 2, 1>, scalar_prefetch = 0 : i64, scratch_operands = 0 : i64, tpu.core_type = #tpu.core_type<tc>, window_params = [{transform_indices = @transform_0, window_bounds = array<i64: 1, 2, 8, 16>}, {transform_indices = @transform_1, window_bounds = array<i64: 1, 2, 8, 16>}, {transform_indices = @transform_2, window_bounds = array<i64: 1, 2, 8, 16>}, {transform_indices = @transform_3, window_bounds = array<i64: 1, 8, 32>}, {transform_indices = @transform_4, window_bounds = array<i64: 1, 1, 8>}, {pipeline_mode = #tpu.pipeline_mode<synchronous>, transform_indices = @transform_5, window_bounds = array<i64: 2, 16, 32>}, {pipeline_mode = #tpu.pipeline_mode<synchronous>, transform_indices = @transform_6, window_bounds = array<i64: 1, 32>}, {pipeline_mode = #tpu.pipeline_mode<synchronous>, transform_indices = @transform_7, window_bounds = array<i64: 1, 32>}, {pipeline_mode = #tpu.pipeline_mode<synchronous>, transform_indices = @transform_8, window_bounds = array<i64: 1, 32>}, {pipeline_mode = #tpu.pipeline_mode<synchronous>, transform_indices = @transform_9, window_bounds = array<i64: 32, 64>}, {pipeline_mode = #tpu.pipeline_mode<synchronous>, transform_indices = @transform_10, window_bounds = array<i64: 1, 64>}, {pipeline_mode = #tpu.pipeline_mode<synchronous>, transform_indices = @transform_11, window_bounds = array<i64: 64, 32>}, {pipeline_mode = #tpu.pipeline_mode<synchronous>, transform_indices = @transform_12, window_bounds = array<i64: 1, 32>}, {pipeline_mode = #tpu.pipeline_mode<synchronous>, transform_indices = @transform_13, window_bounds = array<i64: 1, 32>}, {pipeline_mode = #tpu.pipeline_mode<synchronous>, transform_indices = @transform_14, window_bounds = array<i64: 1, 32>}, {transform_indices = @transform_15, window_bounds = array<i64: 1, 8, 32>}]} {
    %c0 = arith.constant 0 : index
    %c0_0 = arith.constant 0 : index
    %c0_1 = arith.constant 0 : index
    %c0_2 = arith.constant 0 : index
    %0 = vector.load %arg2[%c0, %c0_0, %c0_1, %c0_2] : memref<1x2x8x16xbf16, #tpu.memory_space<vmem>>, vector<1x2x8x16xbf16>
    %1 = vector.shape_cast %0 : vector<1x2x8x16xbf16> to vector<2x8x16xbf16>
    %c0_3 = arith.constant 0 : index
    %c0_4 = arith.constant 0 : index
    %c0_5 = arith.constant 0 : index
    %c0_6 = arith.constant 0 : index
    %2 = vector.load %arg3[%c0_3, %c0_4, %c0_5, %c0_6] : memref<1x2x8x16xbf16, #tpu.memory_space<vmem>>, vector<1x2x8x16xbf16>
    %3 = vector.shape_cast %2 : vector<1x2x8x16xbf16> to vector<2x8x16xbf16>
    %c0_7 = arith.constant 0 : index
    %c0_8 = arith.constant 0 : index
    %c0_9 = arith.constant 0 : index
    %c0_10 = arith.constant 0 : index
    %4 = vector.load %arg4[%c0_7, %c0_8, %c0_9, %c0_10] : memref<1x2x8x16xbf16, #tpu.memory_space<vmem>>, vector<1x2x8x16xbf16>
    %5 = vector.shape_cast %4 : vector<1x2x8x16xbf16> to vector<2x8x16xbf16>
    %c0_11 = arith.constant 0 : index
    %c0_12 = arith.constant 0 : index
    %c0_13 = arith.constant 0 : index
    %6 = vector.load %arg5[%c0_11, %c0_12, %c0_13] : memref<1x8x32xbf16, #tpu.memory_space<vmem>>, vector<1x8x32xbf16>
    %7 = vector.shape_cast %6 : vector<1x8x32xbf16> to vector<8x32xbf16>
    %8 = arith.extf %7 : vector<8x32xbf16> to vector<8x32xf32>
    %c0_14 = arith.constant 0 : index
    %c0_15 = arith.constant 0 : index
    %c0_16 = arith.constant 0 : index
    %9 = vector.load %arg6[%c0_14, %c0_15, %c0_16] : memref<1x1x8xf32, #tpu.memory_space<vmem>>, vector<1x1x8xf32>
    %10 = vector.shape_cast %9 : vector<1x1x8xf32> to vector<1x8xf32>
    %cst = arith.constant 2.500000e-01 : bf16
    %11 = vector.broadcast %cst : bf16 to vector<2x8x16xbf16>
    %12 = arith.mulf %1, %11 : vector<2x8x16xbf16>
    "tpu.trace_start"() <{level = 10 : i32, message = "hqd,hkd->hqk"}> : () -> ()
    %cst_17 = arith.constant dense<0.000000e+00> : vector<2x8x8xf32>
    %13 = tpu.matmul %12, %3, %cst_17 {dimension_numbers = #tpu.dot_dimension_numbers<[2], [2], [1], [1], [0, 0, 0, 1, 1, 1], [0], [0]>} : vector<2x8x16xbf16>, vector<2x8x16xbf16>, vector<2x8x8xf32> -> vector<2x8x8xf32>
    "tpu.trace_stop"() : () -> ()
    %14 = vector.shape_cast %10 : vector<1x8xf32> to vector<1x1x8xf32>
    %15 = vector.broadcast %14 : vector<1x1x8xf32> to vector<2x8x8xf32>
    %16 = arith.addf %13, %15 : vector<2x8x8xf32>
    %cst_18 = arith.constant dense<0xFF800000> : vector<2x8xf32>
    %17 = vector.multi_reduction <maximumf>, %16, %cst_18 [2] : vector<2x8x8xf32> to vector<2x8xf32>
    %18 = vector.shape_cast %17 : vector<2x8xf32> to vector<2x8x1xf32>
    %19 = vector.broadcast %18 : vector<2x8x1xf32> to vector<2x8x8xf32>
    %20 = arith.subf %16, %19 : vector<2x8x8xf32>
    %21 = math.exp %20 : vector<2x8x8xf32>
    %cst_19 = arith.constant dense<0.000000e+00> : vector<2x8xf32>
    %22 = vector.multi_reduction <add>, %21, %cst_19 [2] : vector<2x8x8xf32> to vector<2x8xf32>
    %23 = vector.shape_cast %22 : vector<2x8xf32> to vector<2x8x1xf32>
    %24 = tpu.reciprocal %23 {approx = true} : vector<2x8x1xf32> -> vector<2x8x1xf32>
    %25 = vector.broadcast %24 : vector<2x8x1xf32> to vector<2x8x8xf32>
    %26 = arith.mulf %21, %25 : vector<2x8x8xf32>
    %27 = arith.truncf %26 : vector<2x8x8xf32> to vector<2x8x8xbf16>
    "tpu.trace_start"() <{level = 10 : i32, message = "hqk,hkd->hqd"}> : () -> ()
    %cst_20 = arith.constant dense<0.000000e+00> : vector<2x8x16xf32>
    %28 = tpu.matmul %27, %5, %cst_20 {dimension_numbers = #tpu.dot_dimension_numbers<[2], [1], [1], [2], [0, 0, 0, 1, 1, 2], [0], [0]>} : vector<2x8x8xbf16>, vector<2x8x16xbf16>, vector<2x8x16xf32> -> vector<2x8x16xf32>
    %cst_21 = arith.constant 0.000000e+00 : f32
    "tpu.trace_stop"() : () -> ()
    %29 = vector.broadcast %cst_21 : f32 to vector<8x32xf32>
    %30 = vector.extract_strided_slice %28 {offsets = [0, 0, 0], sizes = [1, 8, 16], strides = [1, 1, 1]} : vector<2x8x16xf32> to vector<1x8x16xf32>
    %31 = vector.shape_cast %30 : vector<1x8x16xf32> to vector<8x16xf32>
    %32 = arith.truncf %31 : vector<8x16xf32> to vector<8x16xbf16>
    %c0_22 = arith.constant 0 : index
    %c0_23 = arith.constant 0 : index
    %c0_24 = arith.constant 0 : index
    %33 = vector.load %arg7[%c0_22, %c0_23, %c0_24] : memref<2x16x32xbf16, #tpu.memory_space<vmem>>, vector<1x16x32xbf16>
    %34 = vector.shape_cast %33 : vector<1x16x32xbf16> to vector<16x32xbf16>
    %cst_25 = arith.constant dense<0.000000e+00> : vector<8x32xf32>
    %35 = tpu.matmul %32, %34, %cst_25 {dimension_numbers = #tpu.dot_dimension_numbers<[1], [0], [0], [1], [0, 0, 1, 1], [], []>} : vector<8x16xbf16>, vector<16x32xbf16>, vector<8x32xf32> -> vector<8x32xf32>
    %36 = arith.addf %29, %35 : vector<8x32xf32>
    %37 = vector.extract_strided_slice %28 {offsets = [1, 0, 0], sizes = [1, 8, 16], strides = [1, 1, 1]} : vector<2x8x16xf32> to vector<1x8x16xf32>
    %38 = vector.shape_cast %37 : vector<1x8x16xf32> to vector<8x16xf32>
    %39 = arith.truncf %38 : vector<8x16xf32> to vector<8x16xbf16>
    %c1 = arith.constant 1 : index
    %c0_26 = arith.constant 0 : index
    %c0_27 = arith.constant 0 : index
    %40 = vector.load %arg7[%c1, %c0_26, %c0_27] : memref<2x16x32xbf16, #tpu.memory_space<vmem>>, vector<1x16x32xbf16>
    %41 = vector.shape_cast %40 : vector<1x16x32xbf16> to vector<16x32xbf16>
    %cst_28 = arith.constant dense<0.000000e+00> : vector<8x32xf32>
    %42 = tpu.matmul %39, %41, %cst_28 {dimension_numbers = #tpu.dot_dimension_numbers<[1], [0], [0], [1], [0, 0, 1, 1], [], []>} : vector<8x16xbf16>, vector<16x32xbf16>, vector<8x32xf32> -> vector<8x32xf32>
    %43 = arith.addf %36, %42 : vector<8x32xf32>
    %c0_29 = arith.constant 0 : index
    %c0_30 = arith.constant 0 : index
    %44 = vector.load %arg8[%c0_29, %c0_30] : memref<1x32xf32, #tpu.memory_space<vmem>>, vector<1x32xf32>
    %45 = vector.broadcast %44 : vector<1x32xf32> to vector<8x32xf32>
    %46 = arith.addf %43, %45 : vector<8x32xf32>
    %47 = arith.addf %46, %8 : vector<8x32xf32>
    %c0_31 = arith.constant 0 : index
    %c0_32 = arith.constant 0 : index
    %48 = vector.load %arg9[%c0_31, %c0_32] : memref<1x32xf32, #tpu.memory_space<vmem>>, vector<1x32xf32>
    %c0_33 = arith.constant 0 : index
    %c0_34 = arith.constant 0 : index
    %49 = vector.load %arg10[%c0_33, %c0_34] : memref<1x32xf32, #tpu.memory_space<vmem>>, vector<1x32xf32>
    %cst_35 = arith.constant dense<0.000000e+00> : vector<8xf32>
    %50 = vector.multi_reduction <add>, %47, %cst_35 [1] : vector<8x32xf32> to vector<8xf32>
    %51 = vector.shape_cast %50 : vector<8xf32> to vector<8x1xf32>
    %cst_36 = arith.constant 3.200000e+01 : f32
    %52 = vector.broadcast %cst_36 : f32 to vector<8x1xf32>
    %53 = arith.divf %51, %52 : vector<8x1xf32>
    %54 = vector.broadcast %53 : vector<8x1xf32> to vector<8x32xf32>
    %55 = arith.subf %47, %54 : vector<8x32xf32>
    %56 = arith.mulf %55, %55 : vector<8x32xf32>
    %cst_37 = arith.constant dense<0.000000e+00> : vector<8xf32>
    %57 = vector.multi_reduction <add>, %56, %cst_37 [1] : vector<8x32xf32> to vector<8xf32>
    %58 = vector.shape_cast %57 : vector<8xf32> to vector<8x1xf32>
    %cst_38 = arith.constant 3.200000e+01 : f32
    %59 = vector.broadcast %cst_38 : f32 to vector<8x1xf32>
    %60 = arith.divf %58, %59 : vector<8x1xf32>
    %61 = vector.broadcast %53 : vector<8x1xf32> to vector<8x32xf32>
    %62 = arith.subf %47, %61 : vector<8x32xf32>
    %cst_39 = arith.constant 9.99999996E-13 : f32
    %63 = vector.broadcast %cst_39 : f32 to vector<8x1xf32>
    %64 = arith.addf %60, %63 : vector<8x1xf32>
    %65 = math.rsqrt %64 : vector<8x1xf32>
    %66 = vector.broadcast %65 : vector<8x1xf32> to vector<8x32xf32>
    %67 = arith.mulf %62, %66 : vector<8x32xf32>
    %68 = vector.broadcast %48 : vector<1x32xf32> to vector<8x32xf32>
    %69 = arith.mulf %67, %68 : vector<8x32xf32>
    %70 = vector.broadcast %49 : vector<1x32xf32> to vector<8x32xf32>
    %71 = arith.addf %69, %70 : vector<8x32xf32>
    %72 = arith.truncf %71 : vector<8x32xf32> to vector<8x32xbf16>
    %c0_40 = arith.constant 0 : index
    %c0_41 = arith.constant 0 : index
    %73 = vector.load %arg11[%c0_40, %c0_41] : memref<32x64xbf16, #tpu.memory_space<vmem>>, vector<32x64xbf16>
    %cst_42 = arith.constant dense<0.000000e+00> : vector<8x64xf32>
    %74 = tpu.matmul %72, %73, %cst_42 {dimension_numbers = #tpu.dot_dimension_numbers<[1], [0], [0], [1], [0, 0, 1, 1], [], []>} : vector<8x32xbf16>, vector<32x64xbf16>, vector<8x64xf32> -> vector<8x64xf32>
    %c0_43 = arith.constant 0 : index
    %c0_44 = arith.constant 0 : index
    %75 = vector.load %arg12[%c0_43, %c0_44] : memref<1x64xf32, #tpu.memory_space<vmem>>, vector<1x64xf32>
    %76 = vector.broadcast %75 : vector<1x64xf32> to vector<8x64xf32>
    %77 = arith.addf %74, %76 : vector<8x64xf32>
    %cst_45 = arith.constant 5.000000e-01 : f32
    %78 = vector.broadcast %cst_45 : f32 to vector<8x64xf32>
    %79 = arith.mulf %78, %77 : vector<8x64xf32>
    %cst_46 = arith.constant 0.707106769 : f32
    %80 = vector.broadcast %cst_46 : f32 to vector<8x64xf32>
    %81 = arith.mulf %77, %80 : vector<8x64xf32>
    %cst_47 = arith.constant 0.000000e+00 : f32
    %82 = vector.broadcast %cst_47 : f32 to vector<8x64xf32>
    %83 = arith.cmpf oge, %81, %82 : vector<8x64xf32>
    %cst_48 = arith.constant 1.000000e+00 : f32
    %cst_49 = arith.constant -1.000000e+00 : f32
    %84 = vector.broadcast %cst_48 : f32 to vector<8x64xf32>
    %85 = vector.broadcast %cst_49 : f32 to vector<8x64xf32>
    %86 = arith.select %83, %84, %85 : vector<8x64xi1>, vector<8x64xf32>
    %87 = math.absf %81 : vector<8x64xf32>
    %cst_50 = arith.constant 0.327591091 : f32
    %88 = vector.broadcast %cst_50 : f32 to vector<8x64xf32>
    %89 = arith.mulf %88, %87 : vector<8x64xf32>
    %cst_51 = arith.constant 1.000000e+00 : f32
    %90 = vector.broadcast %cst_51 : f32 to vector<8x64xf32>
    %91 = arith.addf %90, %89 : vector<8x64xf32>
    %92 = tpu.reciprocal %91 {approx = true} : vector<8x64xf32> -> vector<8x64xf32>
    %cst_52 = arith.constant 1.06140542 : f32
    %93 = vector.broadcast %cst_52 : f32 to vector<8x64xf32>
    %94 = arith.mulf %93, %92 : vector<8x64xf32>
    %cst_53 = arith.constant -1.45315206 : f32
    %95 = vector.broadcast %cst_53 : f32 to vector<8x64xf32>
    %96 = arith.addf %94, %95 : vector<8x64xf32>
    %97 = arith.mulf %96, %92 : vector<8x64xf32>
    %cst_54 = arith.constant 1.42141378 : f32
    %98 = vector.broadcast %cst_54 : f32 to vector<8x64xf32>
    %99 = arith.addf %97, %98 : vector<8x64xf32>
    %100 = arith.mulf %99, %92 : vector<8x64xf32>
    %cst_55 = arith.constant -0.284496725 : f32
    %101 = vector.broadcast %cst_55 : f32 to vector<8x64xf32>
    %102 = arith.addf %100, %101 : vector<8x64xf32>
    %103 = arith.mulf %102, %92 : vector<8x64xf32>
    %cst_56 = arith.constant 0.254829586 : f32
    %104 = vector.broadcast %cst_56 : f32 to vector<8x64xf32>
    %105 = arith.addf %103, %104 : vector<8x64xf32>
    %106 = arith.mulf %105, %92 : vector<8x64xf32>
    %cst_57 = arith.constant 0.000000e+00 : f32
    %107 = vector.broadcast %cst_57 : f32 to vector<8x64xf32>
    %108 = arith.subf %107, %87 : vector<8x64xf32>
    %109 = arith.mulf %108, %87 : vector<8x64xf32>
    %110 = math.exp %109 : vector<8x64xf32>
    %111 = arith.mulf %106, %110 : vector<8x64xf32>
    %cst_58 = arith.constant 1.000000e+00 : f32
    %112 = vector.broadcast %cst_58 : f32 to vector<8x64xf32>
    %113 = arith.subf %112, %111 : vector<8x64xf32>
    %114 = arith.mulf %86, %113 : vector<8x64xf32>
    %cst_59 = arith.constant 1.000000e+00 : f32
    %115 = vector.broadcast %cst_59 : f32 to vector<8x64xf32>
    %116 = arith.addf %115, %114 : vector<8x64xf32>
    %117 = arith.mulf %79, %116 : vector<8x64xf32>
    %118 = arith.truncf %117 : vector<8x64xf32> to vector<8x64xbf16>
    %c0_60 = arith.constant 0 : index
    %c0_61 = arith.constant 0 : index
    %119 = vector.load %arg13[%c0_60, %c0_61] : memref<64x32xbf16, #tpu.memory_space<vmem>>, vector<64x32xbf16>
    %cst_62 = arith.constant dense<0.000000e+00> : vector<8x32xf32>
    %120 = tpu.matmul %118, %119, %cst_62 {dimension_numbers = #tpu.dot_dimension_numbers<[1], [0], [0], [1], [0, 0, 1, 1], [], []>} : vector<8x64xbf16>, vector<64x32xbf16>, vector<8x32xf32> -> vector<8x32xf32>
    %c0_63 = arith.constant 0 : index
    %c0_64 = arith.constant 0 : index
    %121 = vector.load %arg14[%c0_63, %c0_64] : memref<1x32xf32, #tpu.memory_space<vmem>>, vector<1x32xf32>
    %122 = vector.broadcast %121 : vector<1x32xf32> to vector<8x32xf32>
    %123 = arith.addf %120, %122 : vector<8x32xf32>
    %124 = arith.addf %123, %71 : vector<8x32xf32>
    %c0_65 = arith.constant 0 : index
    %c0_66 = arith.constant 0 : index
    %125 = vector.load %arg15[%c0_65, %c0_66] : memref<1x32xf32, #tpu.memory_space<vmem>>, vector<1x32xf32>
    %c0_67 = arith.constant 0 : index
    %c0_68 = arith.constant 0 : index
    %126 = vector.load %arg16[%c0_67, %c0_68] : memref<1x32xf32, #tpu.memory_space<vmem>>, vector<1x32xf32>
    %cst_69 = arith.constant dense<0.000000e+00> : vector<8xf32>
    %127 = vector.multi_reduction <add>, %124, %cst_69 [1] : vector<8x32xf32> to vector<8xf32>
    %128 = vector.shape_cast %127 : vector<8xf32> to vector<8x1xf32>
    %cst_70 = arith.constant 3.200000e+01 : f32
    %129 = vector.broadcast %cst_70 : f32 to vector<8x1xf32>
    %130 = arith.divf %128, %129 : vector<8x1xf32>
    %131 = vector.broadcast %130 : vector<8x1xf32> to vector<8x32xf32>
    %132 = arith.subf %124, %131 : vector<8x32xf32>
    %133 = arith.mulf %132, %132 : vector<8x32xf32>
    %cst_71 = arith.constant dense<0.000000e+00> : vector<8xf32>
    %134 = vector.multi_reduction <add>, %133, %cst_71 [1] : vector<8x32xf32> to vector<8xf32>
    %135 = vector.shape_cast %134 : vector<8xf32> to vector<8x1xf32>
    %cst_72 = arith.constant 3.200000e+01 : f32
    %136 = vector.broadcast %cst_72 : f32 to vector<8x1xf32>
    %137 = arith.divf %135, %136 : vector<8x1xf32>
    %138 = vector.broadcast %130 : vector<8x1xf32> to vector<8x32xf32>
    %139 = arith.subf %124, %138 : vector<8x32xf32>
    %cst_73 = arith.constant 9.99999996E-13 : f32
    %140 = vector.broadcast %cst_73 : f32 to vector<8x1xf32>
    %141 = arith.addf %137, %140 : vector<8x1xf32>
    %142 = math.rsqrt %141 : vector<8x1xf32>
    %143 = vector.broadcast %142 : vector<8x1xf32> to vector<8x32xf32>
    %144 = arith.mulf %139, %143 : vector<8x32xf32>
    %145 = vector.broadcast %125 : vector<1x32xf32> to vector<8x32xf32>
    %146 = arith.mulf %144, %145 : vector<8x32xf32>
    %147 = vector.broadcast %126 : vector<1x32xf32> to vector<8x32xf32>
    %148 = arith.addf %146, %147 : vector<8x32xf32>
    %149 = arith.truncf %148 : vector<8x32xf32> to vector<8x32xbf16>
    %c0_74 = arith.constant 0 : index
    %c0_75 = arith.constant 0 : index
    %c0_76 = arith.constant 0 : index
    %150 = vector.load %arg17[%c0_74, %c0_75, %c0_76] : memref<1x8x32xbf16, #tpu.memory_space<vmem>>, vector<1x8x32xbf16>
    %151 = vector.shape_cast %150 : vector<1x8x32xbf16> to vector<8x32xbf16>
    %152 = vector.shape_cast %149 : vector<8x32xbf16> to vector<1x8x32xbf16>
    tpu.vector_store %arg17[%c0_74, %c0_75, %c0_76], %152 {strides = array<i32>} : memref<1x8x32xbf16, #tpu.memory_space<vmem>>, vector<1x8x32xbf16>,
    return
  }
  func.func @transform_0(%arg0: i32, %arg1: i32) -> (i32, i32, i32, i32) {
    %c0_i32 = arith.constant 0 : i32
    %c0_i32_0 = arith.constant 0 : i32
    %c0_i32_1 = arith.constant 0 : i32
    return %arg0, %c0_i32, %arg1, %c0_i32_0 : i32, i32, i32, i32
  }
  func.func @transform_1(%arg0: i32, %arg1: i32) -> (i32, i32, i32, i32) {
    %c0_i32 = arith.constant 0 : i32
    %c0_i32_0 = arith.constant 0 : i32
    %c0_i32_1 = arith.constant 0 : i32
    %c0_i32_2 = arith.constant 0 : i32
    return %arg0, %c0_i32, %c0_i32_0, %c0_i32_1 : i32, i32, i32, i32
  }
  func.func @transform_2(%arg0: i32, %arg1: i32) -> (i32, i32, i32, i32) {
    %c0_i32 = arith.constant 0 : i32
    %c0_i32_0 = arith.constant 0 : i32
    %c0_i32_1 = arith.constant 0 : i32
    %c0_i32_2 = arith.constant 0 : i32
    return %arg0, %c0_i32, %c0_i32_0, %c0_i32_1 : i32, i32, i32, i32
  }
  func.func @transform_3(%arg0: i32, %arg1: i32) -> (i32, i32, i32) {
    %c0_i32 = arith.constant 0 : i32
    %c0_i32_0 = arith.constant 0 : i32
    return %arg0, %arg1, %c0_i32 : i32, i32, i32
  }
  func.func @transform_4(%arg0: i32, %arg1: i32) -> (i32, i32, i32) {
    %c0_i32 = arith.constant 0 : i32
    %c0_i32_0 = arith.constant 0 : i32
    %c0_i32_1 = arith.constant 0 : i32
    return %arg0, %c0_i32, %c0_i32_0 : i32, i32, i32
  }
  func.func @transform_5(%arg0: i32, %arg1: i32) -> (i32, i32, i32) {
    %c0_i32 = arith.constant 0 : i32
    %c0_i32_0 = arith.constant 0 : i32
    %c0_i32_1 = arith.constant 0 : i32
    %c0_i32_2 = arith.constant 0 : i32
    return %c0_i32, %c0_i32_0, %c0_i32_1 : i32, i32, i32
  }
  func.func @transform_6(%arg0: i32, %arg1: i32) -> (i32, i32) {
    %c0_i32 = arith.constant 0 : i32
    %c0_i32_0 = arith.constant 0 : i32
    %c0_i32_1 = arith.constant 0 : i32
    return %c0_i32, %c0_i32_0 : i32, i32
  }
  func.func @transform_7(%arg0: i32, %arg1: i32) -> (i32, i32) {
    %c0_i32 = arith.constant 0 : i32
    %c0_i32_0 = arith.constant 0 : i32
    %c0_i32_1 = arith.constant 0 : i32
    return %c0_i32, %c0_i32_0 : i32, i32
  }
  func.func @transform_8(%arg0: i32, %arg1: i32) -> (i32, i32) {
    %c0_i32 = arith.constant 0 : i32
    %c0_i32_0 = arith.constant 0 : i32
    %c0_i32_1 = arith.constant 0 : i32
    return %c0_i32, %c0_i32_0 : i32, i32
  }
  func.func @transform_9(%arg0: i32, %arg1: i32) -> (i32, i32) {
    %c0_i32 = arith.constant 0 : i32
    %c0_i32_0 = arith.constant 0 : i32
    %c0_i32_1 = arith.constant 0 : i32
    return %c0_i32, %c0_i32_0 : i32, i32
  }
  func.func @transform_10(%arg0: i32, %arg1: i32) -> (i32, i32) {
    %c0_i32 = arith.constant 0 : i32
    %c0_i32_0 = arith.constant 0 : i32
    %c0_i32_1 = arith.constant 0 : i32
    return %c0_i32, %c0_i32_0 : i32, i32
  }
  func.func @transform_11(%arg0: i32, %arg1: i32) -> (i32, i32) {
    %c0_i32 = arith.constant 0 : i32
    %c0_i32_0 = arith.constant 0 : i32
    %c0_i32_1 = arith.constant 0 : i32
    return %c0_i32, %c0_i32_0 : i32, i32
  }
  func.func @transform_12(%arg0: i32, %arg1: i32) -> (i32, i32) {
    %c0_i32 = arith.constant 0 : i32
    %c0_i32_0 = arith.constant 0 : i32
    %c0_i32_1 = arith.constant 0 : i32
    return %c0_i32, %c0_i32_0 : i32, i32
  }
  func.func @transform_13(%arg0: i32, %arg1: i32) -> (i32, i32) {
    %c0_i32 = arith.constant 0 : i32
    %c0_i32_0 = arith.constant 0 : i32
    %c0_i32_1 = arith.constant 0 : i32
    return %c0_i32, %c0_i32_0 : i32, i32
  }
  func.func @transform_14(%arg0: i32, %arg1: i32) -> (i32, i32) {
    %c0_i32 = arith.constant 0 : i32
    %c0_i32_0 = arith.constant 0 : i32
    %c0_i32_1 = arith.constant 0 : i32
    return %c0_i32, %c0_i32_0 : i32, i32
  }
  func.func @transform_15(%arg0: i32, %arg1: i32) -> (i32, i32, i32) {
    %c0_i32 = arith.constant 0 : i32
    %c0_i32_0 = arith.constant 0 : i32
    return %arg0, %arg1, %c0_i32 : i32, i32, i32
  }
}

</mosaic_0001>

<llo_original>
// kernel: tpu_custom_call.1
$region0: #{tpu_custom_call.1}
  #allocation0 [shape = 'u32[]', space=smem, size = 0x4, offset = 0x4, fixed_abs, tag = 'smem constant byte address 0x4 - core index']
  #allocation1 [shape = 'u32[144,128]{1,0:T(1,128)}', space=vmem, size = 0x12000, scoped, tag = 'internal scratch']
  %s0 = inlined_call_operand.hbm [shape: f32[16,128], index: 0, kind: input, shape index: {}]
  %s1 = inlined_call_operand.hbm [shape: f32[8,128], index: 1, kind: input, shape index: {}]
  %s2 = inlined_call_operand.hbm [shape: f32[16,128], index: 2, kind: output, shape index: {}]
  %s3 = sld [smem:[#allocation0]]
  $region49: #{tpu_custom_call.1} parent=0
    _
  %s5 = ssub.s32 1, %s3
  %s6 = scalar_select 0, %s5, %s3
  $region1: #{tpu_custom_call.1} parent=0
    #allocation2 [shape = 'u8[8192]{0}', space=vmem, size = 0x2000, scoped, tag = 'input window, operand 0']
    #allocation3 [shape = 's32[2]{0}', space=sflag, size = 0x8, scoped, tag = 'scoped memory for tpu_custom_call.1']
    #allocation4 [shape = 's32[2]{0}', space=sflag, size = 0x8, scoped, tag = 'scoped memory for tpu_custom_call.1']
    #allocation5 [shape = 'u8[4096]{0}', space=vmem, size = 0x1000, scoped, tag = 'input window, operand 1, single buffered']
    #allocation6 [shape = 's32[1]{0}', space=sflag, size = 0x4, scoped, tag = 'scoped memory for tpu_custom_call.1']
    #allocation7 [shape = 'u8[8192]{0}', space=vmem, size = 0x2000, scoped, tag = 'output window, operand 0']
    %7 = vsyncpa [#allocation3], 0
    %s8 = scalar_lea.sflag [#allocation3], 1
    %9 = vsyncpa %s8, 0
    %10 = vsyncpa [#allocation6], 0
    %11 = vsyncpa [#allocation4], 0
    %s12 = scalar_lea.sflag [#allocation4], 1
    %13 = vsyncpa %s12, 0
    loop: start=0, step=1, limit=4
    $region2: #{tpu_custom_call.1} parent=1 // loop_pre_header
      _
    $region3: #{tpu_custom_call.1} parent=1 // loop_header
      %s15 = sphi 0, %s19
      %p16 = scmp.ge.s32.totalorder %s15, 4
      %s25 = sphi 0, %s27
      %s28 = sphi 0, %s25
      %s29 = sphi 0, %s28
      %s45 = sphi 0, %s29
      %s49 = sphi 0, %s49
      %s51 = sphi 0, %s49
      %s52 = sphi 0, %s51
      %s66 = sphi 0, %s52
      %s72 = sphi 0, %s74
      %s75 = sphi 0, %s72
      %s76 = sphi 0, %s75
      %s92 = sphi 0, %s76
    $region4: #{tpu_custom_call.1} parent=1 // loop_header_branch
      %18 = sbr.rel (%p16) target = $region8
    $region5: #{tpu_custom_call.1} parent=1 // loop_body
      %s20 = ssub.s32 %s15, 1
      %s21 = ssub.s32 %s15, 2
      %s22 = sadd.s32 %s15, 1
      %s23 = ssub.s32 %s15, %s22
      %p24 = scmp.eq.s32.totalorder %s23, 0
      %s26 = sadd.s32 %s25, 1
      %s27 = scalar_select %p24, %s25, %s26
      %p30 = pneg %p24
      %p31 = scmp.eq.s32.totalorder %s15, 1
      %p32 = por %p30, %p31
      %p33 = scmp.ne.s32.totalorder %s25, %s28
      %p34 = scmp.eq.s32.totalorder %s15, 0
      %p35 = por %p33, %p34
      %p36 = scmp.ne.s32.totalorder %s25, %s28
      %p37 = scmp.eq.s32.totalorder %s20, 1
      %p38 = por %p36, %p37
      %p39 = scmp.ne.s32.totalorder %s28, %s29
      %p40 = scmp.eq.s32.totalorder %s20, 0
      %p41 = por %p39, %p40
      %p42 = scmp.ne.s32.totalorder %s28, %s29
      %p43 = scmp.eq.s32.totalorder %s21, 1
      %p44 = por %p42, %p43
      %p46 = scmp.ne.s32.totalorder %s29, %s45
      %p47 = scmp.eq.s32.totalorder %s21, 0
      %p48 = por %p46, %p47
      %s50 = sadd.s32 %s49, 1
      %p53 = scmp.eq.s32.totalorder %s15, 1
      %p54 = scmp.ne.s32.totalorder %s49, %s51
      %p55 = scmp.eq.s32.totalorder %s15, 0
      %p56 = por %p54, %p55
      %p57 = scmp.ne.s32.totalorder %s49, %s51
      %p58 = scmp.eq.s32.totalorder %s20, 1
      %p59 = por %p57, %p58
      %p60 = scmp.ne.s32.totalorder %s51, %s52
      %p61 = scmp.eq.s32.totalorder %s20, 0
      %p62 = por %p60, %p61
      %p63 = scmp.ne.s32.totalorder %s51, %s52
      %p64 = scmp.eq.s32.totalorder %s21, 1
      %p65 = por %p63, %p64
      %p67 = scmp.ne.s32.totalorder %s52, %s66
      %p68 = scmp.eq.s32.totalorder %s21, 0
      %p69 = por %p67, %p68
      %s70 = ssub.s32 %s15, %s22
      %p71 = scmp.eq.s32.totalorder %s70, 0
      %s73 = sadd.s32 %s72, 1
      %s74 = scalar_select %p71, %s72, %s73
      %p77 = pneg %p71
      %p78 = scmp.eq.s32.totalorder %s15, 1
      %p79 = por %p77, %p78
      %p80 = scmp.ne.s32.totalorder %s72, %s75
      %p81 = scmp.eq.s32.totalorder %s15, 0
      %p82 = por %p80, %p81
      %p83 = scmp.ne.s32.totalorder %s72, %s75
      %p84 = scmp.eq.s32.totalorder %s20, 1
      %p85 = por %p83, %p84
      %p86 = scmp.ne.s32.totalorder %s75, %s76
      %p87 = scmp.eq.s32.totalorder %s20, 0
      %p88 = por %p86, %p87
      %p89 = scmp.ne.s32.totalorder %s75, %s76
      %p90 = scmp.eq.s32.totalorder %s21, 1
      %p91 = por %p89, %p90
      %p93 = scmp.ne.s32.totalorder %s76, %s92
      %p94 = scmp.eq.s32.totalorder %s21, 0
      %p95 = por %p93, %p94
      %p96 = scmp.le.s32.totalorder 1, %s15
      %p97 = scmp.lt.s32.totalorder %s15, 3
      %p98 = pnand %p96, %p97
      %p99 = pneg %p98
      // Predicated region
      $region9: #{tpu_custom_call.1} parent=5 // pred_check
        _
      $region10: #{tpu_custom_call.1} parent=5 // pred_check_branch
        %101 = sbr.rel (%p98) target = $region12
      $region11: #{tpu_custom_call.1} parent=5 // pred_region
        %s102 = ssub.s32 %s15, 1
        // Predicated region
        $region13: #{tpu_custom_call.1} parent=11 // pred_check
          %p103 = pneg %p62
        $region14: #{tpu_custom_call.1} parent=11 // pred_check_branch
          %105 = sbr.rel (%p103) target = $region16
        $region15: #{tpu_custom_call.1} parent=11 // pred_region
          %s107 = ssub.s32 128, 128
          %108 = vsyncadd [#allocation6], %s107
          %s110 = sshll.u32 [#allocation5], 4
          %s111 = int_to_ptr.vmem [resolvable:$true] %s110
          %113 = dma.hbm_to_vmem [thread:$0]  %s1, 128, %s111, [#allocation6]
        $region16: #{tpu_custom_call.1} parent=11 // pred_fallthru
          _
      $region12: #{tpu_custom_call.1} parent=5 // pred_fallthru
        _
      %p114 = scmp.lt.s32.totalorder %s15, 2
      // Predicated region
      $region17: #{tpu_custom_call.1} parent=5 // pred_check
        %p115 = pneg %p114
      $region18: #{tpu_custom_call.1} parent=5 // pred_check_branch
        %117 = sbr.rel (%p115) target = $region20
      $region19: #{tpu_custom_call.1} parent=5 // pred_region
        // Predicated region
        $region21: #{tpu_custom_call.1} parent=19 // pred_check
          %p118 = pneg %p35
        $region22: #{tpu_custom_call.1} parent=19 // pred_check_branch
          %120 = sbr.rel (%p118) target = $region24
        $region23: #{tpu_custom_call.1} parent=19 // pred_region
          %s121 = sand.u32 %s25, 1
          %s122 = scalar_lea.sflag [#allocation3], %s121
          %s123 = sand.u32 %s25, 1
          %s124 = smul.addr %s123, 8
          %s125 = scalar_lea.vmem [#allocation2], %s124
          %s127 = ssub.s32 128, 128
          %128 = vsyncadd %s122, %s127
          %s129 = smul.addr %s15, 128
          %s130 = scalar_lea.hbm %s0, %s129
          %s132 = sshll.u32 %s125, 4
          %s133 = int_to_ptr.vmem [resolvable:$true] %s132
          %135 = dma.hbm_to_vmem [thread:$0]  %s130, 128, %s133, %s122
        $region24: #{tpu_custom_call.1} parent=19 // pred_fallthru
          _
      $region20: #{tpu_custom_call.1} parent=5 // pred_fallthru
        _
      %p136 = scmp.le.s32.totalorder 1, %s15
      %p137 = scmp.lt.s32.totalorder %s15, 3
      %p138 = pnand %p136, %p137
      %p139 = pneg %p138
      // Predicated region
      $region25: #{tpu_custom_call.1} parent=5 // pred_check
        _
      $region26: #{tpu_custom_call.1} parent=5 // pred_check_branch
        %141 = sbr.rel (%p138) target = $region28
      $region27: #{tpu_custom_call.1} parent=5 // pred_region
        %s142 = ssub.s32 %s15, 1
        %s143 = sand.u32 %s28, 1
        %s144 = scalar_lea.sflag [#allocation3], %s143
        %s145 = sand.u32 %s28, 1
        %s146 = smul.addr %s145, 8
        %s147 = scalar_lea.vmem [#allocation2], %s146
        // Predicated region
        $region29: #{tpu_custom_call.1} parent=27 // pred_check
          %p148 = pneg %p41
        $region30: #{tpu_custom_call.1} parent=27 // pred_check_branch
          %150 = sbr.rel (%p148) target = $region32
        $region31: #{tpu_custom_call.1} parent=27 // pred_region
          %151 = dma.done %s144, 128
        $region32: #{tpu_custom_call.1} parent=27 // pred_fallthru
          _
        // Predicated region
        $region33: #{tpu_custom_call.1} parent=27 // pred_check
          %p152 = pneg %p62
        $region34: #{tpu_custom_call.1} parent=27 // pred_check_branch
          %154 = sbr.rel (%p152) target = $region36
        $region35: #{tpu_custom_call.1} parent=27 // pred_region
          %155 = dma.done [#allocation6], 128
        $region36: #{tpu_custom_call.1} parent=27 // pred_fallthru
          _
        %s156 = sand.u32 %s28, 1
        %s157 = scalar_lea.sflag [#allocation3], %s156
        %s158 = sand.u32 %s28, 1
        %s159 = smul.addr %s158, 8
        %s160 = scalar_lea.vmem [#allocation2], %s159
        %p161 = pneg %p41
        %p162 = pneg %p38
        %p163 = pneg %p62
        %p164 = pneg %p59
        %p165 = pneg %p88
        %p166 = pneg %p85
        %s167 = sand.u32 %s75, 1
        %s168 = scalar_lea.sflag [#allocation4], %s167
        %s169 = sand.u32 %s75, 1
        %s170 = smul.addr %s169, 8
        %s171 = scalar_lea.vmem [#allocation7], %s170
        %v172 = vld [vmem:[%s147] sm:$0xff]
        %v173 = vld [vmem:[#allocation5] sm:$0xff]
        %v174 = vadd.f32 %v172, %v173
        %175 = vst [vmem:[%s171] sm:$0xff] %v174
        %s176 = sand.u32 %s75, 1
        %s177 = scalar_lea.sflag [#allocation4], %s176
        %s178 = sand.u32 %s75, 1
        %s179 = smul.addr %s178, 8
        %s180 = scalar_lea.vmem [#allocation7], %s179
        // Predicated region
        $region37: #{tpu_custom_call.1} parent=27 // pred_check
          %p181 = pneg %p85
        $region38: #{tpu_custom_call.1} parent=27 // pred_check_branch
          %183 = sbr.rel (%p181) target = $region40
        $region39: #{tpu_custom_call.1} parent=27 // pred_region
          %s185 = ssub.s32 128, 128
          %186 = vsyncadd %s177, %s185
          %s187 = smul.addr %s20, 128
          %s188 = scalar_lea.hbm %s2, %s187
          %s190 = sshll.u32 %s180, 4
          %s191 = int_to_ptr.vmem [resolvable:$true] %s190
          %193 = dma.vmem_to_hbm [thread:$0]  %s191, 128, %s188, %s177
        $region40: #{tpu_custom_call.1} parent=27 // pred_fallthru
          _
      $region28: #{tpu_custom_call.1} parent=5 // pred_fallthru
        _
      %p194 = scmp.le.s32.totalorder 2, %s15
      // Predicated region
      $region41: #{tpu_custom_call.1} parent=5 // pred_check
        %p195 = pneg %p194
      $region42: #{tpu_custom_call.1} parent=5 // pred_check_branch
        %197 = sbr.rel (%p195) target = $region44
      $region43: #{tpu_custom_call.1} parent=5 // pred_region
        %s198 = ssub.s32 %s15, 2
        // Predicated region
        $region45: #{tpu_custom_call.1} parent=43 // pred_check
          %p199 = pneg %p91
        $region46: #{tpu_custom_call.1} parent=43 // pred_check_branch
          %201 = sbr.rel (%p199) target = $region48
        $region47: #{tpu_custom_call.1} parent=43 // pred_region
          %s202 = sand.u32 %s76, 1
          %s203 = scalar_lea.sflag [#allocation4], %s202
          %s204 = sand.u32 %s76, 1
          %s205 = smul.addr %s204, 8
          %s206 = scalar_lea.vmem [#allocation7], %s205
          %207 = dma.done %s203, 128
        $region48: #{tpu_custom_call.1} parent=43 // pred_fallthru
          _
      $region44: #{tpu_custom_call.1} parent=5 // pred_fallthru
        _
    $region6: #{tpu_custom_call.1} parent=1 // loop_footer
      %s19 = sadd.s32 1, %s15
    $region7: #{tpu_custom_call.1} parent=1 // loop_footer_branch
      %14 = sbr.rel target = $region3
    $region8: #{tpu_custom_call.1} parent=1 // loop_exit
      _
    %208 = vsyncpa [#allocation3], 1
    %s209 = scalar_lea.sflag [#allocation3], 1
    %210 = vsyncpa %s209, 1
    %211 = vsyncpa [#allocation6], 1
    %212 = vsyncpa [#allocation4], 1
    %s213 = scalar_lea.sflag [#allocation4], 1
    %214 = vsyncpa %s213, 1

// kernel: lemma_bert_forward.6
$region0: #{lemma_bert_forward.6}
  #allocation0 [shape = 'u32[]', space=smem, size = 0x4, offset = 0x4, fixed_abs, tag = 'smem constant byte address 0x4 - core index']
  #allocation1 [shape = 'u32[144,128]{1,0:T(1,128)}', space=vmem, size = 0x12000, scoped, tag = 'internal scratch']
  %s0 = inlined_call_operand.vmem [shape: f32[2,8,32], index: 0, kind: input, shape index: {}]
  %s1 = inlined_call_operand.vmem [shape: f32[8,32], index: 1, kind: input, shape index: {}]
  %s2 = inlined_call_operand.vmem [shape: f32[1,32], index: 2, kind: input, shape index: {}]
  %s3 = inlined_call_operand.vmem [shape: f32[1,32], index: 3, kind: input, shape index: {}]
  %s4 = inlined_call_operand.vmem [shape: f32[1,32], index: 4, kind: input, shape index: {}]
  %s5 = inlined_call_operand.vmem [shape: bf16[2,8,32], index: 5, kind: output, shape index: {}]
  %s6 = sld [smem:[#allocation0]]
  $region53: #{lemma_bert_forward.6} parent=0
    _
  %s8 = ssub.s32 1, %s6
  %s9 = scalar_select 0, %s8, %s6
  loop: start=0, step=1, limit=4
  $region2: #{lemma_bert_forward.6} parent=0 // loop_pre_header
    _
  $region3: #{lemma_bert_forward.6} parent=0 // loop_header
    %s11 = sphi 0, %s15
    %p12 = scmp.ge.s32.totalorder %s11, 4
    %s18 = sphi 0, %s30
    %s19 = sphi 0, %s26
    %s20 = sphi 0, %s18
    %s21 = sphi 0, %s19
    %s22 = sphi 0, %s20
    %s23 = sphi 0, %s21
    %s35 = sphi 0, %s37
    %s38 = sphi 0, %s35
    %s39 = sphi 0, %s38
    %s55 = sphi 0, %s39
    %s61 = sphi 0, %s63
    %s64 = sphi 0, %s61
    %s65 = sphi 0, %s64
    %s81 = sphi 0, %s65
    %s85 = sphi 0, %s85
    %s87 = sphi 0, %s85
    %s88 = sphi 0, %s87
    %s102 = sphi 0, %s88
    %s106 = sphi 0, %s106
    %s108 = sphi 0, %s106
    %s109 = sphi 0, %s108
    %s123 = sphi 0, %s109
    %s127 = sphi 0, %s127
    %s129 = sphi 0, %s127
    %s130 = sphi 0, %s129
    %s144 = sphi 0, %s130
    %s152 = sphi 0, %s154
    %s155 = sphi 0, %s152
    %s156 = sphi 0, %s155
    %s172 = sphi 0, %s156
  $region4: #{lemma_bert_forward.6} parent=0 // loop_header_branch
    %14 = sbr.rel (%p12) target = $region8
  $region5: #{lemma_bert_forward.6} parent=0 // loop_body
    %s16 = ssub.s32 %s11, 1
    %s17 = ssub.s32 %s11, 2
    %s24 = sadd.s32 1, %s19
    %p25 = scmp.ge.s32.totalorder %s24, 1
    %s26 = scalar_select %p25, 0, %s24
    %s27 = sadd.s32 1, %s18
    %s28 = scalar_select %p25, %s27, %s18
    %p29 = scmp.ge.s32.totalorder %s28, 2
    %s30 = scalar_select %p29, 0, %s28
    %s31 = ssub.s32 %s18, %s30
    %s32 = ssub.s32 %s19, %s26
    %s33 = sor.u32 %s31, %s32
    %p34 = scmp.eq.s32.totalorder %s33, 0
    %s36 = sadd.s32 %s35, 1
    %s37 = scalar_select %p34, %s35, %s36
    %p40 = pneg %p34
    %p41 = scmp.eq.s32.totalorder %s11, 1
    %p42 = por %p40, %p41
    %p43 = scmp.ne.s32.totalorder %s35, %s38
    %p44 = scmp.eq.s32.totalorder %s11, 0
    %p45 = por %p43, %p44
    %p46 = scmp.ne.s32.totalorder %s35, %s38
    %p47 = scmp.eq.s32.totalorder %s16, 1
    %p48 = por %p46, %p47
    %p49 = scmp.ne.s32.totalorder %s38, %s39
    %p50 = scmp.eq.s32.totalorder %s16, 0
    %p51 = por %p49, %p50
    %p52 = scmp.ne.s32.totalorder %s38, %s39
    %p53 = scmp.eq.s32.totalorder %s17, 1
    %p54 = por %p52, %p53
    %p56 = scmp.ne.s32.totalorder %s39, %s55
    %p57 = scmp.eq.s32.totalorder %s17, 0
    %p58 = por %p56, %p57
    %s59 = ssub.s32 %s19, %s26
    %p60 = scmp.eq.s32.totalorder %s59, 0
    %s62 = sadd.s32 %s61, 1
    %s63 = scalar_select %p60, %s61, %s62
    %p66 = pneg %p60
    %p67 = scmp.eq.s32.totalorder %s11, 1
    %p68 = por %p66, %p67
    %p69 = scmp.ne.s32.totalorder %s61, %s64
    %p70 = scmp.eq.s32.totalorder %s11, 0
    %p71 = por %p69, %p70
    %p72 = scmp.ne.s32.totalorder %s61, %s64
    %p73 = scmp.eq.s32.totalorder %s16, 1
    %p74 = por %p72, %p73
    %p75 = scmp.ne.s32.totalorder %s64, %s65
    %p76 = scmp.eq.s32.totalorder %s16, 0
    %p77 = por %p75, %p76
    %p78 = scmp.ne.s32.totalorder %s64, %s65
    %p79 = scmp.eq.s32.totalorder %s17, 1
    %p80 = por %p78, %p79
    %p82 = scmp.ne.s32.totalorder %s65, %s81
    %p83 = scmp.eq.s32.totalorder %s17, 0
    %p84 = por %p82, %p83
    %s86 = sadd.s32 %s85, 1
    %p89 = scmp.eq.s32.totalorder %s11, 1
    %p90 = scmp.ne.s32.totalorder %s85, %s87
    %p91 = scmp.eq.s32.totalorder %s11, 0
    %p92 = por %p90, %p91
    %p93 = scmp.ne.s32.totalorder %s85, %s87
    %p94 = scmp.eq.s32.totalorder %s16, 1
    %p95 = por %p93, %p94
    %p96 = scmp.ne.s32.totalorder %s87, %s88
    %p97 = scmp.eq.s32.totalorder %s16, 0
    %p98 = por %p96, %p97
    %p99 = scmp.ne.s32.totalorder %s87, %s88
    %p100 = scmp.eq.s32.totalorder %s17, 1
    %p101 = por %p99, %p100
    %p103 = scmp.ne.s32.totalorder %s88, %s102
    %p104 = scmp.eq.s32.totalorder %s17, 0
    %p105 = por %p103, %p104
    %s107 = sadd.s32 %s106, 1
    %p110 = scmp.eq.s32.totalorder %s11, 1
    %p111 = scmp.ne.s32.totalorder %s106, %s108
    %p112 = scmp.eq.s32.totalorder %s11, 0
    %p113 = por %p111, %p112
    %p114 = scmp.ne.s32.totalorder %s106, %s108
    %p115 = scmp.eq.s32.totalorder %s16, 1
    %p116 = por %p114, %p115
    %p117 = scmp.ne.s32.totalorder %s108, %s109
    %p118 = scmp.eq.s32.totalorder %s16, 0
    %p119 = por %p117, %p118
    %p120 = scmp.ne.s32.totalorder %s108, %s109
    %p121 = scmp.eq.s32.totalorder %s17, 1
    %p122 = por %p120, %p121
    %p124 = scmp.ne.s32.totalorder %s109, %s123
    %p125 = scmp.eq.s32.totalorder %s17, 0
    %p126 = por %p124, %p125
    %s128 = sadd.s32 %s127, 1
    %p131 = scmp.eq.s32.totalorder %s11, 1
    %p132 = scmp.ne.s32.totalorder %s127, %s129
    %p133 = scmp.eq.s32.totalorder %s11, 0
    %p134 = por %p132, %p133
    %p135 = scmp.ne.s32.totalorder %s127, %s129
    %p136 = scmp.eq.s32.totalorder %s16, 1
    %p137 = por %p135, %p136
    %p138 = scmp.ne.s32.totalorder %s129, %s130
    %p139 = scmp.eq.s32.totalorder %s16, 0
    %p140 = por %p138, %p139
    %p141 = scmp.ne.s32.totalorder %s129, %s130
    %p142 = scmp.eq.s32.totalorder %s17, 1
    %p143 = por %p141, %p142
    %p145 = scmp.ne.s32.totalorder %s130, %s144
    %p146 = scmp.eq.s32.totalorder %s17, 0
    %p147 = por %p145, %p146
    %s148 = ssub.s32 %s18, %s30
    %s149 = ssub.s32 %s19, %s26
    %s150 = sor.u32 %s148, %s149
    %p151 = scmp.eq.s32.totalorder %s150, 0
    %s153 = sadd.s32 %s152, 1
    %s154 = scalar_select %p151, %s152, %s153
    %p157 = pneg %p151
    %p158 = scmp.eq.s32.totalorder %s11, 1
    %p159 = por %p157, %p158
    %p160 = scmp.ne.s32.totalorder %s152, %s155
    %p161 = scmp.eq.s32.totalorder %s11, 0
    %p162 = por %p160, %p161
    %p163 = scmp.ne.s32.totalorder %s152, %s155
    %p164 = scmp.eq.s32.totalorder %s16, 1
    %p165 = por %p163, %p164
    %p166 = scmp.ne.s32.totalorder %s155, %s156
    %p167 = scmp.eq.s32.totalorder %s16, 0
    %p168 = por %p166, %p167
    %p169 = scmp.ne.s32.totalorder %s155, %s156
    %p170 = scmp.eq.s32.totalorder %s17, 1
    %p171 = por %p169, %p170
    %p173 = scmp.ne.s32.totalorder %s156, %s172
    %p174 = scmp.eq.s32.totalorder %s17, 0
    %p175 = por %p173, %p174
    %p176 = scmp.le.s32.totalorder 1, %s11
    %p177 = scmp.lt.s32.totalorder %s11, 3
    %p178 = pnand %p176, %p177
    %p179 = pneg %p178
    // Predicated region
    $region9: #{lemma_bert_forward.6} parent=5 // pred_check
      _
    $region10: #{lemma_bert_forward.6} parent=5 // pred_check_branch
      %181 = sbr.rel (%p178) target = $region12
    $region11: #{lemma_bert_forward.6} parent=5 // pred_region
      %s182 = ssub.s32 %s11, 1
      // Predicated region
      $region13: #{lemma_bert_forward.6} parent=11 // pred_check
        %p183 = pneg %p77
      $region14: #{lemma_bert_forward.6} parent=11 // pred_check_branch
        %185 = sbr.rel (%p183) target = $region16
      $region15: #{lemma_bert_forward.6} parent=11 // pred_region
        %p186 = scmp.lt.s32.totalorder %s21, 0
        %s187 = scalar_select %p186, %s21, 0
        %s188 = smul.addr %s187, 8
        %s189 = scalar_lea.vmem %s1, %s188
      $region16: #{lemma_bert_forward.6} parent=11 // pred_fallthru
        _
      // Predicated region
      $region17: #{lemma_bert_forward.6} parent=11 // pred_check
        %p190 = pneg %p98
      $region18: #{lemma_bert_forward.6} parent=11 // pred_check_branch
        %192 = sbr.rel (%p190) target = $region20
      $region19: #{lemma_bert_forward.6} parent=11 // pred_region
        _
      $region20: #{lemma_bert_forward.6} parent=11 // pred_fallthru
        _
      // Predicated region
      $region21: #{lemma_bert_forward.6} parent=11 // pred_check
        %p193 = pneg %p119
      $region22: #{lemma_bert_forward.6} parent=11 // pred_check_branch
        %195 = sbr.rel (%p193) target = $region24
      $region23: #{lemma_bert_forward.6} parent=11 // pred_region
        _
      $region24: #{lemma_bert_forward.6} parent=11 // pred_fallthru
        _
      // Predicated region
      $region25: #{lemma_bert_forward.6} parent=11 // pred_check
        %p196 = pneg %p140
      $region26: #{lemma_bert_forward.6} parent=11 // pred_check_branch
        %198 = sbr.rel (%p196) target = $region28
      $region27: #{lemma_bert_forward.6} parent=11 // pred_region
        _
      $region28: #{lemma_bert_forward.6} parent=11 // pred_fallthru
        _
    $region12: #{lemma_bert_forward.6} parent=5 // pred_fallthru
      _
    %p199 = scmp.lt.s32.totalorder %s11, 2
    // Predicated region
    $region29: #{lemma_bert_forward.6} parent=5 // pred_check
      %p200 = pneg %p199
    $region30: #{lemma_bert_forward.6} parent=5 // pred_check_branch
      %202 = sbr.rel (%p200) target = $region32
    $region31: #{lemma_bert_forward.6} parent=5 // pred_region
      // Predicated region
      $region33: #{lemma_bert_forward.6} parent=31 // pred_check
        %p203 = pneg %p45
      $region34: #{lemma_bert_forward.6} parent=31 // pred_check_branch
        %205 = sbr.rel (%p203) target = $region36
      $region35: #{lemma_bert_forward.6} parent=31 // pred_region
        %p206 = scmp.lt.s32.totalorder %s18, 1
        %s207 = scalar_select %p206, %s18, 1
        %p208 = scmp.lt.s32.totalorder %s19, 0
        %s209 = scalar_select %p208, %s19, 0
        %s210 = sadd.s32 %s209, %s207
        %s211 = smul.addr %s210, 8
        %s212 = scalar_lea.vmem %s0, %s211
      $region36: #{lemma_bert_forward.6} parent=31 // pred_fallthru
        _
    $region32: #{lemma_bert_forward.6} parent=5 // pred_fallthru
      _
    %p213 = scmp.le.s32.totalorder 1, %s11
    %p214 = scmp.lt.s32.totalorder %s11, 3
    %p215 = pnand %p213, %p214
    %p216 = pneg %p215
    // Predicated region
    $region37: #{lemma_bert_forward.6} parent=5 // pred_check
      _
    $region38: #{lemma_bert_forward.6} parent=5 // pred_check_branch
      %218 = sbr.rel (%p215) target = $region40
    $region39: #{lemma_bert_forward.6} parent=5 // pred_region
      %s219 = ssub.s32 %s11, 1
      %p220 = scmp.lt.s32.totalorder %s20, 1
      %s221 = scalar_select %p220, %s20, 1
      %p222 = scmp.lt.s32.totalorder %s21, 0
      %s223 = scalar_select %p222, %s21, 0
      %s224 = sadd.s32 %s223, %s221
      %s225 = smul.addr %s224, 8
      %s226 = scalar_lea.vmem %s0, %s225
      %p227 = pneg %p51
      %p228 = pneg %p48
      %p229 = scmp.lt.s32.totalorder %s21, 0
      %s230 = scalar_select %p229, %s21, 0
      %s231 = smul.addr %s230, 8
      %s232 = scalar_lea.vmem %s1, %s231
      %p233 = pneg %p77
      %p234 = pneg %p74
      %p235 = pneg %p98
      %p236 = pneg %p95
      %p237 = pneg %p119
      %p238 = pneg %p116
      %p239 = pneg %p140
      %p240 = pneg %p137
      %p241 = pneg %p168
      %p242 = pneg %p165
      %p243 = scmp.lt.s32.totalorder %s20, 1
      %s244 = scalar_select %p243, %s20, 1
      %p245 = scmp.lt.s32.totalorder %s21, 0
      %s246 = scalar_select %p245, %s21, 0
      %s247 = sadd.s32 %s246, %s244
      %s248 = smul.addr %s247, 4
      %s249 = scalar_lea.vmem %s5, %s248
      %p250 = scmp.lt.s32.totalorder %s20, 1
      %s251 = scalar_select %p250, %s20, 1
      %p252 = scmp.lt.s32.totalorder %s21, 0
      %s253 = scalar_select %p252, %s21, 0
      %s254 = sadd.s32 %s253, %s251
      %s255 = smul.addr %s254, 8
      %s256 = scalar_lea.vmem %s0, %s255
      %p257 = scmp.lt.s32.totalorder %s21, 0
      %s258 = scalar_select %p257, %s21, 0
      %s259 = smul.addr %s258, 8
      %s260 = scalar_lea.vmem %s1, %s259
      %p261 = scmp.lt.s32.totalorder %s20, 1
      %s262 = scalar_select %p261, %s20, 1
      %p263 = scmp.lt.s32.totalorder %s21, 0
      %s264 = scalar_select %p263, %s21, 0
      %s265 = sadd.s32 %s264, %s262
      %s266 = smul.addr %s265, 4
      %s267 = scalar_lea.vmem %s5, %s266
      %v268 = vld [vmem:[%s256] sm:$0xff]
      %v269 = vld [vmem:[%s260] sm:$0xff]
      %v270 = vadd.f32 %v268, %v269
      %v271 = vld [vmem:[%s2] sm:$0x1]
      %v273 = vlaneseq
      %v274 = vshrl.u32 %v273, 7
      %v275 = vsub.s32 0, %v274
      %v276 = vrot.slane %v271, %v275
      %v278 = vadd.f32 %v270, %v276
      %v279 = vld [vmem:[%s3] sm:$0x1]
      %v280 = vld [vmem:[%s4] sm:$0x1]
      %vm281 = vcmask 261120
      %v282 = vsel %vm281, %v278, 0.0
      %283 = vadd.xlane.f32.xlu0 %v282
      %v284 = vpop.xlane.xlu0 %283
      %v285 = vrcp.pop 32.0
      %v286 = vmul.f32 %v284, %v285
      %v287 = vsub.f32 %v278, %v286
      %v288 = vmul.f32 %v287, %v287
      %v289 = vsel %vm281, %v288, 0.0
      %290 = vadd.xlane.f32.xlu0 %v289
      %v291 = vpop.xlane.xlu0 %290
      %v292 = vmul.f32 %v291, %v285
      %v293 = vadd.f32 %v292, 1e-12
      %v294 = vrsqrt.pop %v293
      %v295 = vmul.f32 %v287, %v294
      %v297 = vlaneseq
      %v298 = vshrl.u32 %v297, 7
      %v299 = vsub.s32 0, %v298
      %v300 = vrot.slane %v279, %v299
      %v302 = vmul.f32 %v295, %v300
      %v304 = vlaneseq
      %v305 = vshrl.u32 %v304, 7
      %v306 = vsub.s32 0, %v305
      %v307 = vrot.slane %v280, %v306
      %v309 = vadd.f32 %v302, %v307
      %v310 = vpack.c.bf16 %v309, %v309
      %vm311 = vcmask 257024
      %312 = vst.msk [vmem:[%s267] sm:$0xf] %vm311, %v310
      %p313 = scmp.lt.s32.totalorder %s20, 1
      %s314 = scalar_select %p313, %s20, 1
      %p315 = scmp.lt.s32.totalorder %s21, 0
      %s316 = scalar_select %p315, %s21, 0
      %s317 = sadd.s32 %s316, %s314
      %s318 = smul.addr %s317, 4
      %s319 = scalar_lea.vmem %s5, %s318
      // Predicated region
      $region41: #{lemma_bert_forward.6} parent=39 // pred_check
        %p320 = pneg %p165
      $region42: #{lemma_bert_forward.6} parent=39 // pred_check_branch
        %322 = sbr.rel (%p320) target = $region44
      $region43: #{lemma_bert_forward.6} parent=39 // pred_region
        _
      $region44: #{lemma_bert_forward.6} parent=39 // pred_fallthru
        _
    $region40: #{lemma_bert_forward.6} parent=5 // pred_fallthru
      _
    %p323 = scmp.le.s32.totalorder 2, %s11
    // Predicated region
    $region45: #{lemma_bert_forward.6} parent=5 // pred_check
      %p324 = pneg %p323
    $region46: #{lemma_bert_forward.6} parent=5 // pred_check_branch
      %326 = sbr.rel (%p324) target = $region48
    $region47: #{lemma_bert_forward.6} parent=5 // pred_region
      %s327 = ssub.s32 %s11, 2
      // Predicated region
      $region49: #{lemma_bert_forward.6} parent=47 // pred_check
        %p328 = pneg %p171
      $region50: #{lemma_bert_forward.6} parent=47 // pred_check_branch
        %330 = sbr.rel (%p328) target = $region52
      $region51: #{lemma_bert_forward.6} parent=47 // pred_region
        %p331 = scmp.lt.s32.totalorder %s22, 1
        %s332 = scalar_select %p331, %s22, 1
        %p333 = scmp.lt.s32.totalorder %s23, 0
        %s334 = scalar_select %p333, %s23, 0
        %s335 = sadd.s32 %s334, %s332
        %s336 = smul.addr %s335, 4
        %s337 = scalar_lea.vmem %s5, %s336
      $region52: #{lemma_bert_forward.6} parent=47 // pred_fallthru
        _
    $region48: #{lemma_bert_forward.6} parent=5 // pred_fallthru
      _
  $region6: #{lemma_bert_forward.6} parent=0 // loop_footer
    %s15 = sadd.s32 1, %s11
  $region7: #{lemma_bert_forward.6} parent=0 // loop_footer_branch
    %10 = sbr.rel target = $region3
  $region8: #{lemma_bert_forward.6} parent=0 // loop_exit
    _

// kernel: lemma_bert_forward.7
$region0: #{lemma_bert_forward.7}
  #allocation0 [shape = 'u32[]', space=smem, size = 0x4, offset = 0x4, fixed_abs, tag = 'smem constant byte address 0x4 - core index']
  #allocation1 [shape = 'u32[144,128]{1,0:T(1,128)}', space=vmem, size = 0x12000, scoped, tag = 'internal scratch']
  %s0 = inlined_call_operand.vmem [shape: bf16[16,32], index: 0, kind: input, shape index: {}]
  %s1 = inlined_call_operand.vmem [shape: bf16[32,96], index: 1, kind: input, shape index: {}]
  %s2 = inlined_call_operand.vmem [shape: f32[1,96], index: 2, kind: input, shape index: {}]
  %s3 = inlined_call_operand.vmem [shape: bf16[16,32], index: 3, kind: output, shape index: {0}]
  %s4 = inlined_call_operand.vmem [shape: bf16[16,32], index: 4, kind: output, shape index: {1}]
  %s5 = inlined_call_operand.vmem [shape: bf16[16,32], index: 5, kind: output, shape index: {2}]
  %6 = xla_tuple %s3, %s4, %s5
  %s7 = sld [smem:[#allocation0]]
  $region38: #{lemma_bert_forward.7} parent=0
    _
  %s9 = ssub.s32 1, %s7
  %s10 = scalar_select 0, %s9, %s7
  // Predicated region
  $region2: #{lemma_bert_forward.7} parent=0 // pred_check
    _
  $region3: #{lemma_bert_forward.7} parent=0 // pred_check_branch
    %12 = sbr.rel (0) target = $region5
  $region4: #{lemma_bert_forward.7} parent=0 // pred_region
    _
  $region5: #{lemma_bert_forward.7} parent=0 // pred_fallthru
    _
  // Predicated region
  $region6: #{lemma_bert_forward.7} parent=0 // pred_check
    _
  $region7: #{lemma_bert_forward.7} parent=0 // pred_check_branch
    %14 = sbr.rel (0) target = $region9
  $region8: #{lemma_bert_forward.7} parent=0 // pred_region
    _
  $region9: #{lemma_bert_forward.7} parent=0 // pred_fallthru
    _
  // Predicated region
  $region10: #{lemma_bert_forward.7} parent=0 // pred_check
    _
  $region11: #{lemma_bert_forward.7} parent=0 // pred_check_branch
    %16 = sbr.rel (0) target = $region13
  $region12: #{lemma_bert_forward.7} parent=0 // pred_region
    _
  $region13: #{lemma_bert_forward.7} parent=0 // pred_fallthru
    _
  %v18 = vld [vmem:[%s0] sm:$0xf]
  %v19 = vld [vmem:[%s0 + $0x4] sm:$0xf]
  %v20 = vld [vmem:[%s1] sm:$0xf]
  %v21 = vld [vmem:[%s1 + $0x4] sm:$0xf]
  %v22 = vld [vmem:[%s1 + $0x8] sm:$0xf]
  %v23 = vld [vmem:[%s1 + $0xc] sm:$0xf]
  %v24 = vld [vmem:[%s2] sm:$0x1]
  %v26 = vlaneseq
  %v27 = vshrl.u32 %v26, 7
  %v28 = vsub.s32 0, %v27
  %v29 = vrot.slane %v24, %v28
  %v33 = vunpack.c.l.b16 %v18
  %v34 = vunpack.c.l.b16 %v19
  %v35 = vpack.c.b16 %v34, %v33
  %v40 = vunpack.c.l.b16 %v20
  %v41 = vunpack.c.l.b16 %v21
  %v42 = vunpack.c.l.b16 %v22
  %v43 = vunpack.c.l.b16 %v23
  %v44 = vpack.c.b16 %v41, %v40
  %v45 = vpack.c.b16 %v43, %v42
  %vm48 = vcmask 261120
  %v50 = vsel %vm48, %v35, 0
  %52 = vmatprep.subr.bf16.mxu0 0
  %53 = vmatpush1.bf16.msra.mxu0 %v44
  %54 = vmatprep.subr.bf16.mxu0 0
  %55 = vmatpush1.bf16.msra.mxu0 %v45
  %56 = vmatprep.subr.bf16.mxu0 0
  %57 = vmatpush1.bf16.msra.mxu0 0
  %58 = vmatprep.subr.bf16.mxu0 0
  %59 = vmatpush1.bf16.msra.mxu0 0
  %60 = vmatprep.subr.bf16.mxu0 0
  %61 = vmatpush1.bf16.msra.mxu0 0
  %62 = vmatprep.subr.bf16.mxu0 0
  %63 = vmatpush1.bf16.msra.mxu0 0
  %64 = vmatprep.subr.bf16.mxu0 0
  %65 = vmatpush1.bf16.msra.mxu0 0
  %66 = vmatprep.subr.bf16.mxu0 0
  %67 = vmatpush1.bf16.msra.mxu0 0
  %68 = vmatprep.subr.bf16.mxu0 0
  %69 = vmatpush1.bf16.msra.mxu0 0
  %70 = vmatprep.subr.bf16.mxu0 0
  %71 = vmatpush1.bf16.msra.mxu0 0
  %72 = vmatprep.subr.bf16.mxu0 0
  %73 = vmatpush1.bf16.msra.mxu0 0
  %74 = vmatprep.subr.bf16.mxu0 0
  %75 = vmatpush1.bf16.msra.mxu0 0
  %76 = vmatprep.subr.bf16.mxu0 0
  %77 = vmatpush1.bf16.msra.mxu0 0
  %78 = vmatprep.subr.bf16.mxu0 0
  %79 = vmatpush1.bf16.msra.mxu0 0
  %80 = vmatprep.subr.bf16.mxu0 0
  %81 = vmatpush1.bf16.msra.mxu0 0
  %82 = vmatprep.subr.bf16.mxu0 0
  %83 = vmatpush1.bf16.msra.mxu0 0
  %84 = vmatprep.mubr.bf16.mxu0 0
  %85 = vmatmul.mubr.bf16.gmra.mrb[0].mxu0 %v50
  %v86 = vpop.f32.mrb[0].mxu0
  %v87 = vadd.f32 %v29, %v86
  %v88 = vpop.f32.mrb[0].mxu0
  %v89 = vpop.f32.mrb[0].mxu0
  %v90 = vadd.f32 %v29, %v89
  %v91 = vpop.f32.mrb[0].mxu0
  %92 = vdwg.mxu0
  %v93 = vpack.c.bf16 %v90, %v87
  %v95 = vunpack.c.l.b16 %v93
  %v96 = vunpack.c.h.b16 %v93
  %v97 = vpack.c.b16 %v95, %v95
  %v98 = vpack.c.b16 %v96, %v96
  %vm101 = vcmask 257024
  %102 = vst.msk [vmem:[%s3] sm:$0xf] %vm101, %v97
  %103 = vst.msk [vmem:[%s3 + $0x4] sm:$0xf] %vm101, %v98
  %104 = vrot.lane.b32.xlu0 %v97, 96
  %v105 = vpop.permute.xlu0 %104
  %106 = vrot.lane.b32.xlu0 %v98, 96
  %v107 = vpop.permute.xlu0 %106
  %110 = vst.msk [vmem:[%s4] sm:$0xf] %vm101, %v105
  %111 = vst.msk [vmem:[%s4 + $0x4] sm:$0xf] %vm101, %v107
  %112 = vrot.lane.b32.xlu0 %v97, 64
  %v113 = vpop.permute.xlu0 %112
  %114 = vrot.lane.b32.xlu0 %v98, 64
  %v115 = vpop.permute.xlu0 %114
  %118 = vst.msk [vmem:[%s5] sm:$0xf] %vm101, %v113
  %119 = vst.msk [vmem:[%s5 + $0x4] sm:$0xf] %vm101, %v115
  // Predicated region
  $region14: #{lemma_bert_forward.7} parent=0 // pred_check
    _
  $region15: #{lemma_bert_forward.7} parent=0 // pred_check_branch
    %121 = sbr.rel (0) target = $region17
  $region16: #{lemma_bert_forward.7} parent=0 // pred_region
    _
  $region17: #{lemma_bert_forward.7} parent=0 // pred_fallthru
    _
  // Predicated region
  $region18: #{lemma_bert_forward.7} parent=0 // pred_check
    _
  $region19: #{lemma_bert_forward.7} parent=0 // pred_check_branch
    %123 = sbr.rel (0) target = $region21
  $region20: #{lemma_bert_forward.7} parent=0 // pred_region
    _
  $region21: #{lemma_bert_forward.7} parent=0 // pred_fallthru
    _
  // Predicated region
  $region22: #{lemma_bert_forward.7} parent=0 // pred_check
    _
  $region23: #{lemma_bert_forward.7} parent=0 // pred_check_branch
    %125 = sbr.rel (0) target = $region25
  $region24: #{lemma_bert_forward.7} parent=0 // pred_region
    _
  $region25: #{lemma_bert_forward.7} parent=0 // pred_fallthru
    _
  // Predicated region
  $region26: #{lemma_bert_forward.7} parent=0 // pred_check
    _
  $region27: #{lemma_bert_forward.7} parent=0 // pred_check_branch
    %127 = sbr.rel (0) target = $region29
  $region28: #{lemma_bert_forward.7} parent=0 // pred_region
    _
  $region29: #{lemma_bert_forward.7} parent=0 // pred_fallthru
    _
  // Predicated region
  $region30: #{lemma_bert_forward.7} parent=0 // pred_check
    _
  $region31: #{lemma_bert_forward.7} parent=0 // pred_check_branch
    %129 = sbr.rel (0) target = $region33
  $region32: #{lemma_bert_forward.7} parent=0 // pred_region
    _
  $region33: #{lemma_bert_forward.7} parent=0 // pred_fallthru
    _
  // Predicated region
  $region34: #{lemma_bert_forward.7} parent=0 // pred_check
    _
  $region35: #{lemma_bert_forward.7} parent=0 // pred_check_branch
    %131 = sbr.rel (0) target = $region37
  $region36: #{lemma_bert_forward.7} parent=0 // pred_region
    _
  $region37: #{lemma_bert_forward.7} parent=0 // pred_fallthru
    _

// kernel: lemma_bert_forward.11
$region0: #{lemma_bert_forward.11}
  #allocation0 [shape = 'u32[]', space=smem, size = 0x4, offset = 0x4, fixed_abs, tag = 'smem constant byte address 0x4 - core index']
  #allocation1 [shape = 'u32[144,128]{1,0:T(1,128)}', space=vmem, size = 0x12000, scoped, tag = 'internal scratch']
  %s0 = inlined_call_operand.vmem [shape: bf16[16,32], index: 0, kind: input, shape index: {}]
  %s1 = inlined_call_operand.vmem [shape: bf16[32,128], index: 1, kind: input, shape index: {}]
  %s2 = inlined_call_operand.vmem [shape: f32[1,128], index: 2, kind: input, shape index: {}]
  %s3 = inlined_call_operand.vmem [shape: f32[16,128], index: 3, kind: output, shape index: {}]
  %s4 = sld [smem:[#allocation0]]
  $region22: #{lemma_bert_forward.11} parent=0
    _
  %s6 = ssub.s32 1, %s4
  %s7 = scalar_select 0, %s6, %s4
  // Predicated region
  $region2: #{lemma_bert_forward.11} parent=0 // pred_check
    _
  $region3: #{lemma_bert_forward.11} parent=0 // pred_check_branch
    %9 = sbr.rel (0) target = $region5
  $region4: #{lemma_bert_forward.11} parent=0 // pred_region
    _
  $region5: #{lemma_bert_forward.11} parent=0 // pred_fallthru
    _
  // Predicated region
  $region6: #{lemma_bert_forward.11} parent=0 // pred_check
    _
  $region7: #{lemma_bert_forward.11} parent=0 // pred_check_branch
    %11 = sbr.rel (0) target = $region9
  $region8: #{lemma_bert_forward.11} parent=0 // pred_region
    _
  $region9: #{lemma_bert_forward.11} parent=0 // pred_fallthru
    _
  // Predicated region
  $region10: #{lemma_bert_forward.11} parent=0 // pred_check
    _
  $region11: #{lemma_bert_forward.11} parent=0 // pred_check_branch
    %13 = sbr.rel (0) target = $region13
  $region12: #{lemma_bert_forward.11} parent=0 // pred_region
    _
  $region13: #{lemma_bert_forward.11} parent=0 // pred_fallthru
    _
  %v15 = vld [vmem:[%s0] sm:$0xf]
  %v16 = vld [vmem:[%s0 + $0x4] sm:$0xf]
  %v17 = vld [vmem:[%s1] sm:$0xf]
  %v18 = vld [vmem:[%s1 + $0x4] sm:$0xf]
  %v19 = vld [vmem:[%s1 + $0x8] sm:$0xf]
  %v20 = vld [vmem:[%s1 + $0xc] sm:$0xf]
  %v21 = vld [vmem:[%s2] sm:$0x1]
  %v23 = vlaneseq
  %v24 = vshrl.u32 %v23, 7
  %v25 = vsub.s32 0, %v24
  %v26 = vrot.slane %v21, %v25
  %v30 = vunpack.c.l.b16 %v15
  %v31 = vunpack.c.l.b16 %v16
  %v32 = vpack.c.b16 %v31, %v30
  %v37 = vunpack.c.l.b16 %v17
  %v38 = vunpack.c.l.b16 %v18
  %v39 = vunpack.c.l.b16 %v19
  %v40 = vunpack.c.l.b16 %v20
  %v41 = vpack.c.b16 %v38, %v37
  %v42 = vpack.c.b16 %v40, %v39
  %vm45 = vcmask 261120
  %v47 = vsel %vm45, %v32, 0
  %49 = vmatprep.subr.bf16.mxu0 0
  %50 = vmatpush1.bf16.msra.mxu0 %v41
  %51 = vmatprep.subr.bf16.mxu0 0
  %52 = vmatpush1.bf16.msra.mxu0 %v42
  %53 = vmatprep.subr.bf16.mxu0 0
  %54 = vmatpush1.bf16.msra.mxu0 0
  %55 = vmatprep.subr.bf16.mxu0 0
  %56 = vmatpush1.bf16.msra.mxu0 0
  %57 = vmatprep.subr.bf16.mxu0 0
  %58 = vmatpush1.bf16.msra.mxu0 0
  %59 = vmatprep.subr.bf16.mxu0 0
  %60 = vmatpush1.bf16.msra.mxu0 0
  %61 = vmatprep.subr.bf16.mxu0 0
  %62 = vmatpush1.bf16.msra.mxu0 0
  %63 = vmatprep.subr.bf16.mxu0 0
  %64 = vmatpush1.bf16.msra.mxu0 0
  %65 = vmatprep.subr.bf16.mxu0 0
  %66 = vmatpush1.bf16.msra.mxu0 0
  %67 = vmatprep.subr.bf16.mxu0 0
  %68 = vmatpush1.bf16.msra.mxu0 0
  %69 = vmatprep.subr.bf16.mxu0 0
  %70 = vmatpush1.bf16.msra.mxu0 0
  %71 = vmatprep.subr.bf16.mxu0 0
  %72 = vmatpush1.bf16.msra.mxu0 0
  %73 = vmatprep.subr.bf16.mxu0 0
  %74 = vmatpush1.bf16.msra.mxu0 0
  %75 = vmatprep.subr.bf16.mxu0 0
  %76 = vmatpush1.bf16.msra.mxu0 0
  %77 = vmatprep.subr.bf16.mxu0 0
  %78 = vmatpush1.bf16.msra.mxu0 0
  %79 = vmatprep.subr.bf16.mxu0 0
  %80 = vmatpush1.bf16.msra.mxu0 0
  %81 = vmatprep.mubr.bf16.mxu0 0
  %82 = vmatmul.mubr.bf16.gmra.mrb[0].mxu0 %v47
  %v83 = vpop.f32.mrb[0].mxu0
  %v84 = vadd.f32 %v26, %v83
  %v85 = vpop.f32.mrb[0].mxu0
  %v86 = vpop.f32.mrb[0].mxu0
  %v87 = vadd.f32 %v26, %v86
  %v88 = vpop.f32.mrb[0].mxu0
  %89 = vdwg.mxu0
  %90 = vst [vmem:[%s3] sm:$0xff] %v84
  %91 = vst [vmem:[%s3 + $0x8] sm:$0xff] %v87
  // Predicated region
  $region14: #{lemma_bert_forward.11} parent=0 // pred_check
    _
  $region15: #{lemma_bert_forward.11} parent=0 // pred_check_branch
    %93 = sbr.rel (0) target = $region17
  $region16: #{lemma_bert_forward.11} parent=0 // pred_region
    _
  $region17: #{lemma_bert_forward.11} parent=0 // pred_fallthru
    _
  // Predicated region
  $region18: #{lemma_bert_forward.11} parent=0 // pred_check
    _
  $region19: #{lemma_bert_forward.11} parent=0 // pred_check_branch
    %95 = sbr.rel (0) target = $region21
  $region20: #{lemma_bert_forward.11} parent=0 // pred_region
    _
  $region21: #{lemma_bert_forward.11} parent=0 // pred_fallthru
    _

// kernel: lemma_bert_forward.8
$region0: #{lemma_bert_forward.8}
  #allocation0 [shape = 'u32[]', space=smem, size = 0x4, offset = 0x4, fixed_abs, tag = 'smem constant byte address 0x4 - core index']
  #allocation1 [shape = 'u32[144,128]{1,0:T(1,128)}', space=vmem, size = 0x12000, scoped, tag = 'internal scratch']
  %s0 = inlined_call_operand.vmem [shape: bf16[2,2,8,16], index: 0, kind: input, shape index: {}]
  %s1 = inlined_call_operand.vmem [shape: bf16[2,2,8,16], index: 1, kind: input, shape index: {}]
  %s2 = inlined_call_operand.vmem [shape: bf16[2,2,8,16], index: 2, kind: input, shape index: {}]
  %s3 = inlined_call_operand.vmem [shape: bf16[2,8,32], index: 3, kind: input, shape index: {}]
  %s4 = inlined_call_operand.vmem [shape: f32[2,1,8], index: 4, kind: input, shape index: {}]
  %s5 = inlined_call_operand.vmem [shape: bf16[2,16,32], index: 5, kind: input, shape index: {}]
  %s6 = inlined_call_operand.vmem [shape: f32[1,32], index: 6, kind: input, shape index: {}]
  %s7 = inlined_call_operand.vmem [shape: f32[1,32], index: 7, kind: input, shape index: {}]
  %s8 = inlined_call_operand.vmem [shape: f32[1,32], index: 8, kind: input, shape index: {}]
  %s9 = inlined_call_operand.vmem [shape: bf16[32,64], index: 9, kind: input, shape index: {}]
  %s10 = inlined_call_operand.vmem [shape: f32[1,64], index: 10, kind: input, shape index: {}]
  %s11 = inlined_call_operand.vmem [shape: bf16[64,32], index: 11, kind: input, shape index: {}]
  %s12 = inlined_call_operand.vmem [shape: f32[1,32], index: 12, kind: input, shape index: {}]
  %s13 = inlined_call_operand.vmem [shape: f32[1,32], index: 13, kind: input, shape index: {}]
  %s14 = inlined_call_operand.vmem [shape: f32[1,32], index: 14, kind: input, shape index: {}]
  %s15 = inlined_call_operand.vmem [shape: bf16[2,8,32], index: 15, kind: output, shape index: {}]
  %s16 = sld [smem:[#allocation0]]
  $region93: #{lemma_bert_forward.8} parent=0
    _
  %s18 = ssub.s32 1, %s16
  %s19 = scalar_select 0, %s18, %s16
  loop: start=0, step=1, limit=4
  $region2: #{lemma_bert_forward.8} parent=0 // loop_pre_header
    _
  $region3: #{lemma_bert_forward.8} parent=0 // loop_header
    %s21 = sphi 0, %s25
    %p22 = scmp.ge.s32.totalorder %s21, 4
    %s28 = sphi 0, %s40
    %s29 = sphi 0, %s36
    %s30 = sphi 0, %s28
    %s31 = sphi 0, %s29
    %s32 = sphi 0, %s30
    %s33 = sphi 0, %s31
    %s45 = sphi 0, %s47
    %s48 = sphi 0, %s45
    %s49 = sphi 0, %s48
    %s65 = sphi 0, %s49
    %s71 = sphi 0, %s73
    %s74 = sphi 0, %s71
    %s75 = sphi 0, %s74
    %s91 = sphi 0, %s75
    %s97 = sphi 0, %s99
    %s100 = sphi 0, %s97
    %s101 = sphi 0, %s100
    %s117 = sphi 0, %s101
    %s125 = sphi 0, %s127
    %s128 = sphi 0, %s125
    %s129 = sphi 0, %s128
    %s145 = sphi 0, %s129
    %s151 = sphi 0, %s153
    %s154 = sphi 0, %s151
    %s155 = sphi 0, %s154
    %s171 = sphi 0, %s155
    %s175 = sphi 0, %s175
    %s177 = sphi 0, %s175
    %s178 = sphi 0, %s177
    %s192 = sphi 0, %s178
    %s196 = sphi 0, %s196
    %s198 = sphi 0, %s196
    %s199 = sphi 0, %s198
    %s213 = sphi 0, %s199
    %s217 = sphi 0, %s217
    %s219 = sphi 0, %s217
    %s220 = sphi 0, %s219
    %s234 = sphi 0, %s220
    %s238 = sphi 0, %s238
    %s240 = sphi 0, %s238
    %s241 = sphi 0, %s240
    %s255 = sphi 0, %s241
    %s259 = sphi 0, %s259
    %s261 = sphi 0, %s259
    %s262 = sphi 0, %s261
    %s276 = sphi 0, %s262
    %s280 = sphi 0, %s280
    %s282 = sphi 0, %s280
    %s283 = sphi 0, %s282
    %s297 = sphi 0, %s283
    %s301 = sphi 0, %s301
    %s303 = sphi 0, %s301
    %s304 = sphi 0, %s303
    %s318 = sphi 0, %s304
    %s322 = sphi 0, %s322
    %s324 = sphi 0, %s322
    %s325 = sphi 0, %s324
    %s339 = sphi 0, %s325
    %s343 = sphi 0, %s343
    %s345 = sphi 0, %s343
    %s346 = sphi 0, %s345
    %s360 = sphi 0, %s346
    %s364 = sphi 0, %s364
    %s366 = sphi 0, %s364
    %s367 = sphi 0, %s366
    %s381 = sphi 0, %s367
    %s389 = sphi 0, %s391
    %s392 = sphi 0, %s389
    %s393 = sphi 0, %s392
    %s409 = sphi 0, %s393
  $region4: #{lemma_bert_forward.8} parent=0 // loop_header_branch
    %24 = sbr.rel (%p22) target = $region8
  $region5: #{lemma_bert_forward.8} parent=0 // loop_body
    %s26 = ssub.s32 %s21, 1
    %s27 = ssub.s32 %s21, 2
    %s34 = sadd.s32 1, %s29
    %p35 = scmp.ge.s32.totalorder %s34, 1
    %s36 = scalar_select %p35, 0, %s34
    %s37 = sadd.s32 1, %s28
    %s38 = scalar_select %p35, %s37, %s28
    %p39 = scmp.ge.s32.totalorder %s38, 2
    %s40 = scalar_select %p39, 0, %s38
    %s41 = ssub.s32 %s28, %s40
    %s42 = ssub.s32 %s29, %s36
    %s43 = sor.u32 %s41, %s42
    %p44 = scmp.eq.s32.totalorder %s43, 0
    %s46 = sadd.s32 %s45, 1
    %s47 = scalar_select %p44, %s45, %s46
    %p50 = pneg %p44
    %p51 = scmp.eq.s32.totalorder %s21, 1
    %p52 = por %p50, %p51
    %p53 = scmp.ne.s32.totalorder %s45, %s48
    %p54 = scmp.eq.s32.totalorder %s21, 0
    %p55 = por %p53, %p54
    %p56 = scmp.ne.s32.totalorder %s45, %s48
    %p57 = scmp.eq.s32.totalorder %s26, 1
    %p58 = por %p56, %p57
    %p59 = scmp.ne.s32.totalorder %s48, %s49
    %p60 = scmp.eq.s32.totalorder %s26, 0
    %p61 = por %p59, %p60
    %p62 = scmp.ne.s32.totalorder %s48, %s49
    %p63 = scmp.eq.s32.totalorder %s27, 1
    %p64 = por %p62, %p63
    %p66 = scmp.ne.s32.totalorder %s49, %s65
    %p67 = scmp.eq.s32.totalorder %s27, 0
    %p68 = por %p66, %p67
    %s69 = ssub.s32 %s28, %s40
    %p70 = scmp.eq.s32.totalorder %s69, 0
    %s72 = sadd.s32 %s71, 1
    %s73 = scalar_select %p70, %s71, %s72
    %p76 = pneg %p70
    %p77 = scmp.eq.s32.totalorder %s21, 1
    %p78 = por %p76, %p77
    %p79 = scmp.ne.s32.totalorder %s71, %s74
    %p80 = scmp.eq.s32.totalorder %s21, 0
    %p81 = por %p79, %p80
    %p82 = scmp.ne.s32.totalorder %s71, %s74
    %p83 = scmp.eq.s32.totalorder %s26, 1
    %p84 = por %p82, %p83
    %p85 = scmp.ne.s32.totalorder %s74, %s75
    %p86 = scmp.eq.s32.totalorder %s26, 0
    %p87 = por %p85, %p86
    %p88 = scmp.ne.s32.totalorder %s74, %s75
    %p89 = scmp.eq.s32.totalorder %s27, 1
    %p90 = por %p88, %p89
    %p92 = scmp.ne.s32.totalorder %s75, %s91
    %p93 = scmp.eq.s32.totalorder %s27, 0
    %p94 = por %p92, %p93
    %s95 = ssub.s32 %s28, %s40
    %p96 = scmp.eq.s32.totalorder %s95, 0
    %s98 = sadd.s32 %s97, 1
    %s99 = scalar_select %p96, %s97, %s98
    %p102 = pneg %p96
    %p103 = scmp.eq.s32.totalorder %s21, 1
    %p104 = por %p102, %p103
    %p105 = scmp.ne.s32.totalorder %s97, %s100
    %p106 = scmp.eq.s32.totalorder %s21, 0
    %p107 = por %p105, %p106
    %p108 = scmp.ne.s32.totalorder %s97, %s100
    %p109 = scmp.eq.s32.totalorder %s26, 1
    %p110 = por %p108, %p109
    %p111 = scmp.ne.s32.totalorder %s100, %s101
    %p112 = scmp.eq.s32.totalorder %s26, 0
    %p113 = por %p111, %p112
    %p114 = scmp.ne.s32.totalorder %s100, %s101
    %p115 = scmp.eq.s32.totalorder %s27, 1
    %p116 = por %p114, %p115
    %p118 = scmp.ne.s32.totalorder %s101, %s117
    %p119 = scmp.eq.s32.totalorder %s27, 0
    %p120 = por %p118, %p119
    %s121 = ssub.s32 %s28, %s40
    %s122 = ssub.s32 %s29, %s36
    %s123 = sor.u32 %s121, %s122
    %p124 = scmp.eq.s32.totalorder %s123, 0
    %s126 = sadd.s32 %s125, 1
    %s127 = scalar_select %p124, %s125, %s126
    %p130 = pneg %p124
    %p131 = scmp.eq.s32.totalorder %s21, 1
    %p132 = por %p130, %p131
    %p133 = scmp.ne.s32.totalorder %s125, %s128
    %p134 = scmp.eq.s32.totalorder %s21, 0
    %p135 = por %p133, %p134
    %p136 = scmp.ne.s32.totalorder %s125, %s128
    %p137 = scmp.eq.s32.totalorder %s26, 1
    %p138 = por %p136, %p137
    %p139 = scmp.ne.s32.totalorder %s128, %s129
    %p140 = scmp.eq.s32.totalorder %s26, 0
    %p141 = por %p139, %p140
    %p142 = scmp.ne.s32.totalorder %s128, %s129
    %p143 = scmp.eq.s32.totalorder %s27, 1
    %p144 = por %p142, %p143
    %p146 = scmp.ne.s32.totalorder %s129, %s145
    %p147 = scmp.eq.s32.totalorder %s27, 0
    %p148 = por %p146, %p147
    %s149 = ssub.s32 %s28, %s40
    %p150 = scmp.eq.s32.totalorder %s149, 0
    %s152 = sadd.s32 %s151, 1
    %s153 = scalar_select %p150, %s151, %s152
    %p156 = pneg %p150
    %p157 = scmp.eq.s32.totalorder %s21, 1
    %p158 = por %p156, %p157
    %p159 = scmp.ne.s32.totalorder %s151, %s154
    %p160 = scmp.eq.s32.totalorder %s21, 0
    %p161 = por %p159, %p160
    %p162 = scmp.ne.s32.totalorder %s151, %s154
    %p163 = scmp.eq.s32.totalorder %s26, 1
    %p164 = por %p162, %p163
    %p165 = scmp.ne.s32.totalorder %s154, %s155
    %p166 = scmp.eq.s32.totalorder %s26, 0
    %p167 = por %p165, %p166
    %p168 = scmp.ne.s32.totalorder %s154, %s155
    %p169 = scmp.eq.s32.totalorder %s27, 1
    %p170 = por %p168, %p169
    %p172 = scmp.ne.s32.totalorder %s155, %s171
    %p173 = scmp.eq.s32.totalorder %s27, 0
    %p174 = por %p172, %p173
    %s176 = sadd.s32 %s175, 1
    %p179 = scmp.eq.s32.totalorder %s21, 1
    %p180 = scmp.ne.s32.totalorder %s175, %s177
    %p181 = scmp.eq.s32.totalorder %s21, 0
    %p182 = por %p180, %p181
    %p183 = scmp.ne.s32.totalorder %s175, %s177
    %p184 = scmp.eq.s32.totalorder %s26, 1
    %p185 = por %p183, %p184
    %p186 = scmp.ne.s32.totalorder %s177, %s178
    %p187 = scmp.eq.s32.totalorder %s26, 0
    %p188 = por %p186, %p187
    %p189 = scmp.ne.s32.totalorder %s177, %s178
    %p190 = scmp.eq.s32.totalorder %s27, 1
    %p191 = por %p189, %p190
    %p193 = scmp.ne.s32.totalorder %s178, %s192
    %p194 = scmp.eq.s32.totalorder %s27, 0
    %p195 = por %p193, %p194
    %s197 = sadd.s32 %s196, 1
    %p200 = scmp.eq.s32.totalorder %s21, 1
    %p201 = scmp.ne.s32.totalorder %s196, %s198
    %p202 = scmp.eq.s32.totalorder %s21, 0
    %p203 = por %p201, %p202
    %p204 = scmp.ne.s32.totalorder %s196, %s198
    %p205 = scmp.eq.s32.totalorder %s26, 1
    %p206 = por %p204, %p205
    %p207 = scmp.ne.s32.totalorder %s198, %s199
    %p208 = scmp.eq.s32.totalorder %s26, 0
    %p209 = por %p207, %p208
    %p210 = scmp.ne.s32.totalorder %s198, %s199
    %p211 = scmp.eq.s32.totalorder %s27, 1
    %p212 = por %p210, %p211
    %p214 = scmp.ne.s32.totalorder %s199, %s213
    %p215 = scmp.eq.s32.totalorder %s27, 0
    %p216 = por %p214, %p215
    %s218 = sadd.s32 %s217, 1
    %p221 = scmp.eq.s32.totalorder %s21, 1
    %p222 = scmp.ne.s32.totalorder %s217, %s219
    %p223 = scmp.eq.s32.totalorder %s21, 0
    %p224 = por %p222, %p223
    %p225 = scmp.ne.s32.totalorder %s217, %s219
    %p226 = scmp.eq.s32.totalorder %s26, 1
    %p227 = por %p225, %p226
    %p228 = scmp.ne.s32.totalorder %s219, %s220
    %p229 = scmp.eq.s32.totalorder %s26, 0
    %p230 = por %p228, %p229
    %p231 = scmp.ne.s32.totalorder %s219, %s220
    %p232 = scmp.eq.s32.totalorder %s27, 1
    %p233 = por %p231, %p232
    %p235 = scmp.ne.s32.totalorder %s220, %s234
    %p236 = scmp.eq.s32.totalorder %s27, 0
    %p237 = por %p235, %p236
    %s239 = sadd.s32 %s238, 1
    %p242 = scmp.eq.s32.totalorder %s21, 1
    %p243 = scmp.ne.s32.totalorder %s238, %s240
    %p244 = scmp.eq.s32.totalorder %s21, 0
    %p245 = por %p243, %p244
    %p246 = scmp.ne.s32.totalorder %s238, %s240
    %p247 = scmp.eq.s32.totalorder %s26, 1
    %p248 = por %p246, %p247
    %p249 = scmp.ne.s32.totalorder %s240, %s241
    %p250 = scmp.eq.s32.totalorder %s26, 0
    %p251 = por %p249, %p250
    %p252 = scmp.ne.s32.totalorder %s240, %s241
    %p253 = scmp.eq.s32.totalorder %s27, 1
    %p254 = por %p252, %p253
    %p256 = scmp.ne.s32.totalorder %s241, %s255
    %p257 = scmp.eq.s32.totalorder %s27, 0
    %p258 = por %p256, %p257
    %s260 = sadd.s32 %s259, 1
    %p263 = scmp.eq.s32.totalorder %s21, 1
    %p264 = scmp.ne.s32.totalorder %s259, %s261
    %p265 = scmp.eq.s32.totalorder %s21, 0
    %p266 = por %p264, %p265
    %p267 = scmp.ne.s32.totalorder %s259, %s261
    %p268 = scmp.eq.s32.totalorder %s26, 1
    %p269 = por %p267, %p268
    %p270 = scmp.ne.s32.totalorder %s261, %s262
    %p271 = scmp.eq.s32.totalorder %s26, 0
    %p272 = por %p270, %p271
    %p273 = scmp.ne.s32.totalorder %s261, %s262
    %p274 = scmp.eq.s32.totalorder %s27, 1
    %p275 = por %p273, %p274
    %p277 = scmp.ne.s32.totalorder %s262, %s276
    %p278 = scmp.eq.s32.totalorder %s27, 0
    %p279 = por %p277, %p278
    %s281 = sadd.s32 %s280, 1
    %p284 = scmp.eq.s32.totalorder %s21, 1
    %p285 = scmp.ne.s32.totalorder %s280, %s282
    %p286 = scmp.eq.s32.totalorder %s21, 0
    %p287 = por %p285, %p286
    %p288 = scmp.ne.s32.totalorder %s280, %s282
    %p289 = scmp.eq.s32.totalorder %s26, 1
    %p290 = por %p288, %p289
    %p291 = scmp.ne.s32.totalorder %s282, %s283
    %p292 = scmp.eq.s32.totalorder %s26, 0
    %p293 = por %p291, %p292
    %p294 = scmp.ne.s32.totalorder %s282, %s283
    %p295 = scmp.eq.s32.totalorder %s27, 1
    %p296 = por %p294, %p295
    %p298 = scmp.ne.s32.totalorder %s283, %s297
    %p299 = scmp.eq.s32.totalorder %s27, 0
    %p300 = por %p298, %p299
    %s302 = sadd.s32 %s301, 1
    %p305 = scmp.eq.s32.totalorder %s21, 1
    %p306 = scmp.ne.s32.totalorder %s301, %s303
    %p307 = scmp.eq.s32.totalorder %s21, 0
    %p308 = por %p306, %p307
    %p309 = scmp.ne.s32.totalorder %s301, %s303
    %p310 = scmp.eq.s32.totalorder %s26, 1
    %p311 = por %p309, %p310
    %p312 = scmp.ne.s32.totalorder %s303, %s304
    %p313 = scmp.eq.s32.totalorder %s26, 0
    %p314 = por %p312, %p313
    %p315 = scmp.ne.s32.totalorder %s303, %s304
    %p316 = scmp.eq.s32.totalorder %s27, 1
    %p317 = por %p315, %p316
    %p319 = scmp.ne.s32.totalorder %s304, %s318
    %p320 = scmp.eq.s32.totalorder %s27, 0
    %p321 = por %p319, %p320
    %s323 = sadd.s32 %s322, 1
    %p326 = scmp.eq.s32.totalorder %s21, 1
    %p327 = scmp.ne.s32.totalorder %s322, %s324
    %p328 = scmp.eq.s32.totalorder %s21, 0
    %p329 = por %p327, %p328
    %p330 = scmp.ne.s32.totalorder %s322, %s324
    %p331 = scmp.eq.s32.totalorder %s26, 1
    %p332 = por %p330, %p331
    %p333 = scmp.ne.s32.totalorder %s324, %s325
    %p334 = scmp.eq.s32.totalorder %s26, 0
    %p335 = por %p333, %p334
    %p336 = scmp.ne.s32.totalorder %s324, %s325
    %p337 = scmp.eq.s32.totalorder %s27, 1
    %p338 = por %p336, %p337
    %p340 = scmp.ne.s32.totalorder %s325, %s339
    %p341 = scmp.eq.s32.totalorder %s27, 0
    %p342 = por %p340, %p341
    %s344 = sadd.s32 %s343, 1
    %p347 = scmp.eq.s32.totalorder %s21, 1
    %p348 = scmp.ne.s32.totalorder %s343, %s345
    %p349 = scmp.eq.s32.totalorder %s21, 0
    %p350 = por %p348, %p349
    %p351 = scmp.ne.s32.totalorder %s343, %s345
    %p352 = scmp.eq.s32.totalorder %s26, 1
    %p353 = por %p351, %p352
    %p354 = scmp.ne.s32.totalorder %s345, %s346
    %p355 = scmp.eq.s32.totalorder %s26, 0
    %p356 = por %p354, %p355
    %p357 = scmp.ne.s32.totalorder %s345, %s346
    %p358 = scmp.eq.s32.totalorder %s27, 1
    %p359 = por %p357, %p358
    %p361 = scmp.ne.s32.totalorder %s346, %s360
    %p362 = scmp.eq.s32.totalorder %s27, 0
    %p363 = por %p361, %p362
    %s365 = sadd.s32 %s364, 1
    %p368 = scmp.eq.s32.totalorder %s21, 1
    %p369 = scmp.ne.s32.totalorder %s364, %s366
    %p370 = scmp.eq.s32.totalorder %s21, 0
    %p371 = por %p369, %p370
    %p372 = scmp.ne.s32.totalorder %s364, %s366
    %p373 = scmp.eq.s32.totalorder %s26, 1
    %p374 = por %p372, %p373
    %p375 = scmp.ne.s32.totalorder %s366, %s367
    %p376 = scmp.eq.s32.totalorder %s26, 0
    %p377 = por %p375, %p376
    %p378 = scmp.ne.s32.totalorder %s366, %s367
    %p379 = scmp.eq.s32.totalorder %s27, 1
    %p380 = por %p378, %p379
    %p382 = scmp.ne.s32.totalorder %s367, %s381
    %p383 = scmp.eq.s32.totalorder %s27, 0
    %p384 = por %p382, %p383
    %s385 = ssub.s32 %s28, %s40
    %s386 = ssub.s32 %s29, %s36
    %s387 = sor.u32 %s385, %s386
    %p388 = scmp.eq.s32.totalorder %s387, 0
    %s390 = sadd.s32 %s389, 1
    %s391 = scalar_select %p388, %s389, %s390
    %p394 = pneg %p388
    %p395 = scmp.eq.s32.totalorder %s21, 1
    %p396 = por %p394, %p395
    %p397 = scmp.ne.s32.totalorder %s389, %s392
    %p398 = scmp.eq.s32.totalorder %s21, 0
    %p399 = por %p397, %p398
    %p400 = scmp.ne.s32.totalorder %s389, %s392
    %p401 = scmp.eq.s32.totalorder %s26, 1
    %p402 = por %p400, %p401
    %p403 = scmp.ne.s32.totalorder %s392, %s393
    %p404 = scmp.eq.s32.totalorder %s26, 0
    %p405 = por %p403, %p404
    %p406 = scmp.ne.s32.totalorder %s392, %s393
    %p407 = scmp.eq.s32.totalorder %s27, 1
    %p408 = por %p406, %p407
    %p410 = scmp.ne.s32.totalorder %s393, %s409
    %p411 = scmp.eq.s32.totalorder %s27, 0
    %p412 = por %p410, %p411
    %p413 = scmp.le.s32.totalorder 1, %s21
    %p414 = scmp.lt.s32.totalorder %s21, 3
    %p415 = pnand %p413, %p414
    %p416 = pneg %p415
    // Predicated region
    $region9: #{lemma_bert_forward.8} parent=5 // pred_check
      _
    $region10: #{lemma_bert_forward.8} parent=5 // pred_check_branch
      %418 = sbr.rel (%p415) target = $region12
    $region11: #{lemma_bert_forward.8} parent=5 // pred_region
      %s419 = ssub.s32 %s21, 1
      // Predicated region
      $region13: #{lemma_bert_forward.8} parent=11 // pred_check
        %p420 = pneg %p188
      $region14: #{lemma_bert_forward.8} parent=11 // pred_check_branch
        %422 = sbr.rel (%p420) target = $region16
      $region15: #{lemma_bert_forward.8} parent=11 // pred_region
        _
      $region16: #{lemma_bert_forward.8} parent=11 // pred_fallthru
        _
      // Predicated region
      $region17: #{lemma_bert_forward.8} parent=11 // pred_check
        %p423 = pneg %p209
      $region18: #{lemma_bert_forward.8} parent=11 // pred_check_branch
        %425 = sbr.rel (%p423) target = $region20
      $region19: #{lemma_bert_forward.8} parent=11 // pred_region
        _
      $region20: #{lemma_bert_forward.8} parent=11 // pred_fallthru
        _
      // Predicated region
      $region21: #{lemma_bert_forward.8} parent=11 // pred_check
        %p426 = pneg %p230
      $region22: #{lemma_bert_forward.8} parent=11 // pred_check_branch
        %428 = sbr.rel (%p426) target = $region24
      $region23: #{lemma_bert_forward.8} parent=11 // pred_region
        _
      $region24: #{lemma_bert_forward.8} parent=11 // pred_fallthru
        _
      // Predicated region
      $region25: #{lemma_bert_forward.8} parent=11 // pred_check
        %p429 = pneg %p251
      $region26: #{lemma_bert_forward.8} parent=11 // pred_check_branch
        %431 = sbr.rel (%p429) target = $region28
      $region27: #{lemma_bert_forward.8} parent=11 // pred_region
        _
      $region28: #{lemma_bert_forward.8} parent=11 // pred_fallthru
        _
      // Predicated region
      $region29: #{lemma_bert_forward.8} parent=11 // pred_check
        %p432 = pneg %p272
      $region30: #{lemma_bert_forward.8} parent=11 // pred_check_branch
        %434 = sbr.rel (%p432) target = $region32
      $region31: #{lemma_bert_forward.8} parent=11 // pred_region
        _
      $region32: #{lemma_bert_forward.8} parent=11 // pred_fallthru
        _
      // Predicated region
      $region33: #{lemma_bert_forward.8} parent=11 // pred_check
        %p435 = pneg %p293
      $region34: #{lemma_bert_forward.8} parent=11 // pred_check_branch
        %437 = sbr.rel (%p435) target = $region36
      $region35: #{lemma_bert_forward.8} parent=11 // pred_region
        _
      $region36: #{lemma_bert_forward.8} parent=11 // pred_fallthru
        _
      // Predicated region
      $region37: #{lemma_bert_forward.8} parent=11 // pred_check
        %p438 = pneg %p314
      $region38: #{lemma_bert_forward.8} parent=11 // pred_check_branch
        %440 = sbr.rel (%p438) target = $region40
      $region39: #{lemma_bert_forward.8} parent=11 // pred_region
        _
      $region40: #{lemma_bert_forward.8} parent=11 // pred_fallthru
        _
      // Predicated region
      $region41: #{lemma_bert_forward.8} parent=11 // pred_check
        %p441 = pneg %p335
      $region42: #{lemma_bert_forward.8} parent=11 // pred_check_branch
        %443 = sbr.rel (%p441) target = $region44
      $region43: #{lemma_bert_forward.8} parent=11 // pred_region
        _
      $region44: #{lemma_bert_forward.8} parent=11 // pred_fallthru
        _
      // Predicated region
      $region45: #{lemma_bert_forward.8} parent=11 // pred_check
        %p444 = pneg %p356
      $region46: #{lemma_bert_forward.8} parent=11 // pred_check_branch
        %446 = sbr.rel (%p444) target = $region48
      $region47: #{lemma_bert_forward.8} parent=11 // pred_region
        _
      $region48: #{lemma_bert_forward.8} parent=11 // pred_fallthru
        _
      // Predicated region
      $region49: #{lemma_bert_forward.8} parent=11 // pred_check
        %p447 = pneg %p377
      $region50: #{lemma_bert_forward.8} parent=11 // pred_check_branch
        %449 = sbr.rel (%p447) target = $region52
      $region51: #{lemma_bert_forward.8} parent=11 // pred_region
        _
      $region52: #{lemma_bert_forward.8} parent=11 // pred_fallthru
        _
    $region12: #{lemma_bert_forward.8} parent=5 // pred_fallthru
      _
    %p450 = scmp.lt.s32.totalorder %s21, 2
    // Predicated region
    $region53: #{lemma_bert_forward.8} parent=5 // pred_check
      %p451 = pneg %p450
    $region54: #{lemma_bert_forward.8} parent=5 // pred_check_branch
      %453 = sbr.rel (%p451) target = $region56
    $region55: #{lemma_bert_forward.8} parent=5 // pred_region
      // Predicated region
      $region57: #{lemma_bert_forward.8} parent=55 // pred_check
        %p454 = pneg %p55
      $region58: #{lemma_bert_forward.8} parent=55 // pred_check_branch
        %456 = sbr.rel (%p454) target = $region60
      $region59: #{lemma_bert_forward.8} parent=55 // pred_region
        %p457 = scmp.lt.s32.totalorder %s28, 1
        %s458 = scalar_select %p457, %s28, 1
        %p459 = scmp.lt.s32.totalorder %s29, 0
        %s460 = scalar_select %p459, %s29, 0
        %s461 = smul.addr %s458, 2
        %s462 = sadd.s32 %s460, %s461
        %s463 = smul.addr %s462, 4
        %s464 = scalar_lea.vmem %s0, %s463
      $region60: #{lemma_bert_forward.8} parent=55 // pred_fallthru
        _
      // Predicated region
      $region61: #{lemma_bert_forward.8} parent=55 // pred_check
        %p465 = pneg %p81
      $region62: #{lemma_bert_forward.8} parent=55 // pred_check_branch
        %467 = sbr.rel (%p465) target = $region64
      $region63: #{lemma_bert_forward.8} parent=55 // pred_region
        %p468 = scmp.lt.s32.totalorder %s28, 1
        %s469 = scalar_select %p468, %s28, 1
        %s470 = smul.addr %s469, 2
        %s471 = smul.addr %s470, 4
        %s472 = scalar_lea.vmem %s1, %s471
      $region64: #{lemma_bert_forward.8} parent=55 // pred_fallthru
        _
      // Predicated region
      $region65: #{lemma_bert_forward.8} parent=55 // pred_check
        %p473 = pneg %p107
      $region66: #{lemma_bert_forward.8} parent=55 // pred_check_branch
        %475 = sbr.rel (%p473) target = $region68
      $region67: #{lemma_bert_forward.8} parent=55 // pred_region
        %p476 = scmp.lt.s32.totalorder %s28, 1
        %s477 = scalar_select %p476, %s28, 1
        %s478 = smul.addr %s477, 2
        %s479 = smul.addr %s478, 4
        %s480 = scalar_lea.vmem %s2, %s479
      $region68: #{lemma_bert_forward.8} parent=55 // pred_fallthru
        _
      // Predicated region
      $region69: #{lemma_bert_forward.8} parent=55 // pred_check
        %p481 = pneg %p135
      $region70: #{lemma_bert_forward.8} parent=55 // pred_check_branch
        %483 = sbr.rel (%p481) target = $region72
      $region71: #{lemma_bert_forward.8} parent=55 // pred_region
        %p484 = scmp.lt.s32.totalorder %s28, 1
        %s485 = scalar_select %p484, %s28, 1
        %p486 = scmp.lt.s32.totalorder %s29, 0
        %s487 = scalar_select %p486, %s29, 0
        %s488 = sadd.s32 %s487, %s485
        %s489 = smul.addr %s488, 4
        %s490 = scalar_lea.vmem %s3, %s489
      $region72: #{lemma_bert_forward.8} parent=55 // pred_fallthru
        _
      // Predicated region
      $region73: #{lemma_bert_forward.8} parent=55 // pred_check
        %p491 = pneg %p161
      $region74: #{lemma_bert_forward.8} parent=55 // pred_check_branch
        %493 = sbr.rel (%p491) target = $region76
      $region75: #{lemma_bert_forward.8} parent=55 // pred_region
        %p494 = scmp.lt.s32.totalorder %s28, 1
        %s495 = scalar_select %p494, %s28, 1
        %s496 = scalar_lea.vmem %s4, %s495
      $region76: #{lemma_bert_forward.8} parent=55 // pred_fallthru
        _
    $region56: #{lemma_bert_forward.8} parent=5 // pred_fallthru
      _
    %p497 = scmp.le.s32.totalorder 1, %s21
    %p498 = scmp.lt.s32.totalorder %s21, 3
    %p499 = pnand %p497, %p498
    %p500 = pneg %p499
    // Predicated region
    $region77: #{lemma_bert_forward.8} parent=5 // pred_check
      _
    $region78: #{lemma_bert_forward.8} parent=5 // pred_check_branch
      %502 = sbr.rel (%p499) target = $region80
    $region79: #{lemma_bert_forward.8} parent=5 // pred_region
      %s503 = ssub.s32 %s21, 1
      %p504 = scmp.lt.s32.totalorder %s30, 1
      %s505 = scalar_select %p504, %s30, 1
      %p506 = scmp.lt.s32.totalorder %s31, 0
      %s507 = scalar_select %p506, %s31, 0
      %s508 = smul.addr %s505, 2
      %s509 = sadd.s32 %s507, %s508
      %s510 = smul.addr %s509, 4
      %s511 = scalar_lea.vmem %s0, %s510
      %p512 = pneg %p61
      %p513 = pneg %p58
      %p514 = scmp.lt.s32.totalorder %s30, 1
      %s515 = scalar_select %p514, %s30, 1
      %s516 = smul.addr %s515, 2
      %s517 = smul.addr %s516, 4
      %s518 = scalar_lea.vmem %s1, %s517
      %p519 = pneg %p87
      %p520 = pneg %p84
      %p521 = scmp.lt.s32.totalorder %s30, 1
      %s522 = scalar_select %p521, %s30, 1
      %s523 = smul.addr %s522, 2
      %s524 = smul.addr %s523, 4
      %s525 = scalar_lea.vmem %s2, %s524
      %p526 = pneg %p113
      %p527 = pneg %p110
      %p528 = scmp.lt.s32.totalorder %s30, 1
      %s529 = scalar_select %p528, %s30, 1
      %p530 = scmp.lt.s32.totalorder %s31, 0
      %s531 = scalar_select %p530, %s31, 0
      %s532 = sadd.s32 %s531, %s529
      %s533 = smul.addr %s532, 4
      %s534 = scalar_lea.vmem %s3, %s533
      %p535 = pneg %p141
      %p536 = pneg %p138
      %p537 = scmp.lt.s32.totalorder %s30, 1
      %s538 = scalar_select %p537, %s30, 1
      %s539 = scalar_lea.vmem %s4, %s538
      %p540 = pneg %p167
      %p541 = pneg %p164
      %p542 = pneg %p188
      %p543 = pneg %p185
      %p544 = pneg %p209
      %p545 = pneg %p206
      %p546 = pneg %p230
      %p547 = pneg %p227
      %p548 = pneg %p251
      %p549 = pneg %p248
      %p550 = pneg %p272
      %p551 = pneg %p269
      %p552 = pneg %p293
      %p553 = pneg %p290
      %p554 = pneg %p314
      %p555 = pneg %p311
      %p556 = pneg %p335
      %p557 = pneg %p332
      %p558 = pneg %p356
      %p559 = pneg %p353
      %p560 = pneg %p377
      %p561 = pneg %p374
      %p562 = pneg %p405
      %p563 = pneg %p402
      %p564 = scmp.lt.s32.totalorder %s30, 1
      %s565 = scalar_select %p564, %s30, 1
      %p566 = scmp.lt.s32.totalorder %s31, 0
      %s567 = scalar_select %p566, %s31, 0
      %s568 = sadd.s32 %s567, %s565
      %s569 = smul.addr %s568, 4
      %s570 = scalar_lea.vmem %s15, %s569
      %p571 = scmp.lt.s32.totalorder %s30, 1
      %s572 = scalar_select %p571, %s30, 1
      %p573 = scmp.lt.s32.totalorder %s31, 0
      %s574 = scalar_select %p573, %s31, 0
      %s575 = smul.addr %s572, 2
      %s576 = sadd.s32 %s574, %s575
      %s577 = smul.addr %s576, 4
      %s578 = scalar_lea.vmem %s0, %s577
      %p579 = scmp.lt.s32.totalorder %s30, 1
      %s580 = scalar_select %p579, %s30, 1
      %s581 = smul.addr %s580, 2
      %s582 = smul.addr %s581, 4
      %s583 = scalar_lea.vmem %s1, %s582
      %p584 = scmp.lt.s32.totalorder %s30, 1
      %s585 = scalar_select %p584, %s30, 1
      %s586 = smul.addr %s585, 2
      %s587 = smul.addr %s586, 4
      %s588 = scalar_lea.vmem %s2, %s587
      %p589 = scmp.lt.s32.totalorder %s30, 1
      %s590 = scalar_select %p589, %s30, 1
      %p591 = scmp.lt.s32.totalorder %s31, 0
      %s592 = scalar_select %p591, %s31, 0
      %s593 = sadd.s32 %s592, %s590
      %s594 = smul.addr %s593, 4
      %s595 = scalar_lea.vmem %s3, %s594
      %p596 = scmp.lt.s32.totalorder %s30, 1
      %s597 = scalar_select %p596, %s30, 1
      %s598 = scalar_lea.vmem %s4, %s597
      %p599 = scmp.lt.s32.totalorder %s30, 1
      %s600 = scalar_select %p599, %s30, 1
      %p601 = scmp.lt.s32.totalorder %s31, 0
      %s602 = scalar_select %p601, %s31, 0
      %s603 = sadd.s32 %s602, %s600
      %s604 = smul.addr %s603, 4
      %s605 = scalar_lea.vmem %s15, %s604
      %v608 = vld [vmem:[%s578] sm:$0xf]
      %v609 = vld [vmem:[%s578 + $0x4] sm:$0xf]
      %v610 = vld [vmem:[%s583] sm:$0xf]
      %v611 = vld [vmem:[%s583 + $0x4] sm:$0xf]
      %v612 = vld [vmem:[%s588] sm:$0xf]
      %v613 = vld [vmem:[%s588 + $0x4] sm:$0xf]
      %v614 = vld [vmem:[%s595] sm:$0xf]
      %v615 = vunpack.c.l.bf16 %v614
      %v616 = vld [vmem:[%s598] sm:$0x1]
      %v617 = vmul.bf16 %v608, 1048592000
      %v618 = vmul.bf16 %v609, 1048592000
      %v620 = vlaneseq
      %v621 = vshrl.u32 %v620, 7
      %v622 = vsub.s32 0, %v621
      %v623 = vrot.slane %v616, %v622
      %vm625 = vcmask 130048
      %v627 = vsel %vm625, %v617, 0
      %v630 = vsel %vm625, %v610, 0
      %632 = vmatprep.subr.bf16.mxu0 0
      %633 = vmatpush1.bf16.xpose.msra.mxu0 %v630
      %634 = vmatprep.subr.bf16.mxu0 0
      %635 = vmatpush1.bf16.xpose.msra.mxu0 0
      %636 = vmatprep.subr.bf16.mxu0 0
      %637 = vmatpush1.bf16.xpose.msra.mxu0 0
      %638 = vmatprep.subr.bf16.mxu0 0
      %639 = vmatpush1.bf16.xpose.msra.mxu0 0
      %640 = vmatprep.subr.bf16.mxu0 0
      %641 = vmatpush1.bf16.xpose.msra.mxu0 0
      %642 = vmatprep.subr.bf16.mxu0 0
      %643 = vmatpush1.bf16.xpose.msra.mxu0 0
      %644 = vmatprep.subr.bf16.mxu0 0
      %645 = vmatpush1.bf16.xpose.msra.mxu0 0
      %646 = vmatprep.subr.bf16.mxu0 0
      %647 = vmatpush1.bf16.xpose.msra.mxu0 0
      %648 = vmatprep.subr.bf16.mxu0 0
      %649 = vmatpush1.bf16.xpose.msra.mxu0 0
      %650 = vmatprep.subr.bf16.mxu0 0
      %651 = vmatpush1.bf16.xpose.msra.mxu0 0
      %652 = vmatprep.subr.bf16.mxu0 0
      %653 = vmatpush1.bf16.xpose.msra.mxu0 0
      %654 = vmatprep.subr.bf16.mxu0 0
      %655 = vmatpush1.bf16.xpose.msra.mxu0 0
      %656 = vmatprep.subr.bf16.mxu0 0
      %657 = vmatpush1.bf16.xpose.msra.mxu0 0
      %658 = vmatprep.subr.bf16.mxu0 0
      %659 = vmatpush1.bf16.xpose.msra.mxu0 0
      %660 = vmatprep.subr.bf16.mxu0 0
      %661 = vmatpush1.bf16.xpose.msra.mxu0 0
      %662 = vmatprep.subr.bf16.mxu0 0
      %663 = vmatpush1.bf16.xpose.msra.mxu0 0
      %664 = vmatprep.mubr.bf16.mxu0 0
      %665 = vmatmul.mubr.bf16.gmra.mrb[0].mxu0 %v627
      %v666 = vpop.f32.mrb[0].mxu0
      %v667 = vadd.f32 %v623, %v666
      %v668 = vpop.f32.mrb[0].mxu0
      %v669 = vpop.f32.mrb[0].mxu0
      %v670 = vpop.f32.mrb[0].mxu0
      %671 = vdwg.mxu0
      %v673 = vsel %vm625, %v618, 0
      %v676 = vsel %vm625, %v611, 0
      %678 = vmatprep.subr.bf16.mxu0 0
      %679 = vmatpush1.bf16.xpose.msra.mxu0 %v676
      %680 = vmatprep.subr.bf16.mxu0 0
      %681 = vmatpush1.bf16.xpose.msra.mxu0 0
      %682 = vmatprep.subr.bf16.mxu0 0
      %683 = vmatpush1.bf16.xpose.msra.mxu0 0
      %684 = vmatprep.subr.bf16.mxu0 0
      %685 = vmatpush1.bf16.xpose.msra.mxu0 0
      %686 = vmatprep.subr.bf16.mxu0 0
      %687 = vmatpush1.bf16.xpose.msra.mxu0 0
      %688 = vmatprep.subr.bf16.mxu0 0
      %689 = vmatpush1.bf16.xpose.msra.mxu0 0
      %690 = vmatprep.subr.bf16.mxu0 0
      %691 = vmatpush1.bf16.xpose.msra.mxu0 0
      %692 = vmatprep.subr.bf16.mxu0 0
      %693 = vmatpush1.bf16.xpose.msra.mxu0 0
      %694 = vmatprep.subr.bf16.mxu0 0
      %695 = vmatpush1.bf16.xpose.msra.mxu0 0
      %696 = vmatprep.subr.bf16.mxu0 0
      %697 = vmatpush1.bf16.xpose.msra.mxu0 0
      %698 = vmatprep.subr.bf16.mxu0 0
      %699 = vmatpush1.bf16.xpose.msra.mxu0 0
      %700 = vmatprep.subr.bf16.mxu0 0
      %701 = vmatpush1.bf16.xpose.msra.mxu0 0
      %702 = vmatprep.subr.bf16.mxu0 0
      %703 = vmatpush1.bf16.xpose.msra.mxu0 0
      %704 = vmatprep.subr.bf16.mxu0 0
      %705 = vmatpush1.bf16.xpose.msra.mxu0 0
      %706 = vmatprep.subr.bf16.mxu0 0
      %707 = vmatpush1.bf16.xpose.msra.mxu0 0
      %708 = vmatprep.subr.bf16.mxu0 0
      %709 = vmatpush1.bf16.xpose.msra.mxu0 0
      %710 = vmatprep.mubr.bf16.mxu0 0
      %711 = vmatmul.mubr.bf16.gmra.mrb[0].mxu0 %v673
      %v712 = vpop.f32.mrb[0].mxu0
      %v713 = vadd.f32 %v623, %v712
      %v714 = vpop.f32.mrb[0].mxu0
      %v715 = vpop.f32.mrb[0].mxu0
      %v716 = vpop.f32.mrb[0].mxu0
      %717 = vdwg.mxu0
      %vm718 = vcmask 64512
      %v719 = vsel %vm718, %v667, -inf
      %720 = vmax.xlane.f32.xlu0 %v719
      %v721 = vpop.xlane.xlu0 %720
      %v722 = vsel %vm718, %v713, -inf
      %723 = vmax.xlane.f32.xlu0 %v722
      %v724 = vpop.xlane.xlu0 %723
      %v725 = vsub.f32 %v667, %v721
      %v726 = vsub.f32 %v713, %v724
      %v727 = vmul.f32 %v725, 1.442695
      %v728 = vpow.pop %v727
      %v729 = vmul.f32 %v726, 1.442695
      %v730 = vpow.pop %v729
      %v731 = vsel %vm718, %v728, 0.0
      %732 = vadd.xlane.f32.xlu0 %v731
      %v733 = vpop.xlane.xlu0 %732
      %v734 = vsel %vm718, %v730, 0.0
      %735 = vadd.xlane.f32.xlu0 %v734
      %v736 = vpop.xlane.xlu0 %735
      %v737 = vrcp.pop %v733
      %v738 = vrcp.pop %v736
      %v739 = vmul.f32 %v728, %v737
      %v740 = vmul.f32 %v730, %v738
      %v741 = vpack.c.bf16 %v739, %v739
      %v742 = vpack.c.bf16 %v740, %v740
      %v744 = vsel %vm718, %v741, 0
      %vm746 = vcmask 1043456
      %v748 = vsel %vm746, %v612, 0
      %750 = vmatprep.subr.bf16.mxu0 0
      %751 = vmatpush1.bf16.msra.mxu0 %v748
      %752 = vmatprep.subr.bf16.mxu0 0
      %753 = vmatpush1.bf16.msra.mxu0 0
      %754 = vmatprep.subr.bf16.mxu0 0
      %755 = vmatpush1.bf16.msra.mxu0 0
      %756 = vmatprep.subr.bf16.mxu0 0
      %757 = vmatpush1.bf16.msra.mxu0 0
      %758 = vmatprep.subr.bf16.mxu0 0
      %759 = vmatpush1.bf16.msra.mxu0 0
      %760 = vmatprep.subr.bf16.mxu0 0
      %761 = vmatpush1.bf16.msra.mxu0 0
      %762 = vmatprep.subr.bf16.mxu0 0
      %763 = vmatpush1.bf16.msra.mxu0 0
      %764 = vmatprep.subr.bf16.mxu0 0
      %765 = vmatpush1.bf16.msra.mxu0 0
      %766 = vmatprep.subr.bf16.mxu0 0
      %767 = vmatpush1.bf16.msra.mxu0 0
      %768 = vmatprep.subr.bf16.mxu0 0
      %769 = vmatpush1.bf16.msra.mxu0 0
      %770 = vmatprep.subr.bf16.mxu0 0
      %771 = vmatpush1.bf16.msra.mxu0 0
      %772 = vmatprep.subr.bf16.mxu0 0
      %773 = vmatpush1.bf16.msra.mxu0 0
      %774 = vmatprep.subr.bf16.mxu0 0
      %775 = vmatpush1.bf16.msra.mxu0 0
      %776 = vmatprep.subr.bf16.mxu0 0
      %777 = vmatpush1.bf16.msra.mxu0 0
      %778 = vmatprep.subr.bf16.mxu0 0
      %779 = vmatpush1.bf16.msra.mxu0 0
      %780 = vmatprep.subr.bf16.mxu0 0
      %781 = vmatpush1.bf16.msra.mxu0 0
      %782 = vmatprep.mubr.bf16.mxu0 0
      %783 = vmatmul.mubr.bf16.gmra.mrb[0].mxu0 %v744
      %v784 = vpop.f32.mrb[0].mxu0
      %v785 = vadd.f32 0.0, %v784
      %v786 = vpop.f32.mrb[0].mxu0
      %v787 = vpop.f32.mrb[0].mxu0
      %v788 = vpop.f32.mrb[0].mxu0
      %789 = vdwg.mxu0
      %v791 = vsel %vm718, %v742, 0
      %v794 = vsel %vm746, %v613, 0
      %796 = vmatprep.subr.bf16.mxu0 0
      %797 = vmatpush1.bf16.msra.mxu0 %v794
      %798 = vmatprep.subr.bf16.mxu0 0
      %799 = vmatpush1.bf16.msra.mxu0 0
      %800 = vmatprep.subr.bf16.mxu0 0
      %801 = vmatpush1.bf16.msra.mxu0 0
      %802 = vmatprep.subr.bf16.mxu0 0
      %803 = vmatpush1.bf16.msra.mxu0 0
      %804 = vmatprep.subr.bf16.mxu0 0
      %805 = vmatpush1.bf16.msra.mxu0 0
      %806 = vmatprep.subr.bf16.mxu0 0
      %807 = vmatpush1.bf16.msra.mxu0 0
      %808 = vmatprep.subr.bf16.mxu0 0
      %809 = vmatpush1.bf16.msra.mxu0 0
      %810 = vmatprep.subr.bf16.mxu0 0
      %811 = vmatpush1.bf16.msra.mxu0 0
      %812 = vmatprep.subr.bf16.mxu0 0
      %813 = vmatpush1.bf16.msra.mxu0 0
      %814 = vmatprep.subr.bf16.mxu0 0
      %815 = vmatpush1.bf16.msra.mxu0 0
      %816 = vmatprep.subr.bf16.mxu0 0
      %817 = vmatpush1.bf16.msra.mxu0 0
      %818 = vmatprep.subr.bf16.mxu0 0
      %819 = vmatpush1.bf16.msra.mxu0 0
      %820 = vmatprep.subr.bf16.mxu0 0
      %821 = vmatpush1.bf16.msra.mxu0 0
      %822 = vmatprep.subr.bf16.mxu0 0
      %823 = vmatpush1.bf16.msra.mxu0 0
      %824 = vmatprep.subr.bf16.mxu0 0
      %825 = vmatpush1.bf16.msra.mxu0 0
      %826 = vmatprep.subr.bf16.mxu0 0
      %827 = vmatpush1.bf16.msra.mxu0 0
      %828 = vmatprep.mubr.bf16.mxu0 0
      %829 = vmatmul.mubr.bf16.gmra.mrb[0].mxu0 %v791
      %v830 = vpop.f32.mrb[0].mxu0
      %v831 = vadd.f32 0.0, %v830
      %v832 = vpop.f32.mrb[0].mxu0
      %v833 = vpop.f32.mrb[0].mxu0
      %v834 = vpop.f32.mrb[0].mxu0
      %835 = vdwg.mxu0
      %v836 = vpack.c.bf16 %v785, %v785
      %v837 = vld [vmem:[%s5] sm:$0xf]
      %v838 = vld [vmem:[%s5 + $0x4] sm:$0xf]
      %v839 = vpack.c.bf16 %v831, %v831
      %s840 = scalar_lea.vmem %s5, 8
      %v841 = vld [vmem:[%s840] sm:$0xf]
      %v842 = vld [vmem:[%s840 + $0x4] sm:$0xf]
      %v845 = vunpack.c.l.b16 %v841
      %v846 = vunpack.c.l.b16 %v842
      %v847 = vpack.c.b16 %v846, %v845
      %v850 = vsel %vm625, %v839, 0
      %852 = vmatprep.subr.bf16.mxu0 0
      %853 = vmatpush1.bf16.msra.mxu0 %v847
      %854 = vmatprep.subr.bf16.mxu0 0
      %855 = vmatpush1.bf16.msra.mxu0 0
      %856 = vmatprep.subr.bf16.mxu0 0
      %857 = vmatpush1.bf16.msra.mxu0 0
      %858 = vmatprep.subr.bf16.mxu0 0
      %859 = vmatpush1.bf16.msra.mxu0 0
      %860 = vmatprep.subr.bf16.mxu0 0
      %861 = vmatpush1.bf16.msra.mxu0 0
      %862 = vmatprep.subr.bf16.mxu0 0
      %863 = vmatpush1.bf16.msra.mxu0 0
      %864 = vmatprep.subr.bf16.mxu0 0
      %865 = vmatpush1.bf16.msra.mxu0 0
      %866 = vmatprep.subr.bf16.mxu0 0
      %867 = vmatpush1.bf16.msra.mxu0 0
      %868 = vmatprep.subr.bf16.mxu0 0
      %869 = vmatpush1.bf16.msra.mxu0 0
      %870 = vmatprep.subr.bf16.mxu0 0
      %871 = vmatpush1.bf16.msra.mxu0 0
      %872 = vmatprep.subr.bf16.mxu0 0
      %873 = vmatpush1.bf16.msra.mxu0 0
      %874 = vmatprep.subr.bf16.mxu0 0
      %875 = vmatpush1.bf16.msra.mxu0 0
      %876 = vmatprep.subr.bf16.mxu0 0
      %877 = vmatpush1.bf16.msra.mxu0 0
      %878 = vmatprep.subr.bf16.mxu0 0
      %879 = vmatpush1.bf16.msra.mxu0 0
      %880 = vmatprep.subr.bf16.mxu0 0
      %881 = vmatpush1.bf16.msra.mxu0 0
      %882 = vmatprep.subr.bf16.mxu0 0
      %883 = vmatpush1.bf16.msra.mxu0 0
      %884 = vmatprep.mubr.bf16.mxu0 0
      %885 = vmatmul.mubr.bf16.gmra.mrb[0].mxu0 %v850
      %v886 = vpop.f32.mrb[0].mxu0
      %v887 = vadd.f32 0.0, %v886
      %v888 = vpop.f32.mrb[0].mxu0
      %v889 = vpop.f32.mrb[0].mxu0
      %v890 = vpop.f32.mrb[0].mxu0
      %891 = vdwg.mxu0
      %v894 = vunpack.c.l.b16 %v837
      %v895 = vunpack.c.l.b16 %v838
      %v896 = vpack.c.b16 %v895, %v894
      %v899 = vsel %vm625, %v836, 0
      %901 = vmatprep.subr.bf16.mxu0 0
      %902 = vmatpush1.bf16.msra.mxu0 %v896
      %903 = vmatprep.subr.bf16.mxu0 0
      %904 = vmatpush1.bf16.msra.mxu0 0
      %905 = vmatprep.subr.bf16.mxu0 0
      %906 = vmatpush1.bf16.msra.mxu0 0
      %907 = vmatprep.subr.bf16.mxu0 0
      %908 = vmatpush1.bf16.msra.mxu0 0
      %909 = vmatprep.subr.bf16.mxu0 0
      %910 = vmatpush1.bf16.msra.mxu0 0
      %911 = vmatprep.subr.bf16.mxu0 0
      %912 = vmatpush1.bf16.msra.mxu0 0
      %913 = vmatprep.subr.bf16.mxu0 0
      %914 = vmatpush1.bf16.msra.mxu0 0
      %915 = vmatprep.subr.bf16.mxu0 0
      %916 = vmatpush1.bf16.msra.mxu0 0
      %917 = vmatprep.subr.bf16.mxu0 0
      %918 = vmatpush1.bf16.msra.mxu0 0
      %919 = vmatprep.subr.bf16.mxu0 0
      %920 = vmatpush1.bf16.msra.mxu0 0
      %921 = vmatprep.subr.bf16.mxu0 0
      %922 = vmatpush1.bf16.msra.mxu0 0
      %923 = vmatprep.subr.bf16.mxu0 0
      %924 = vmatpush1.bf16.msra.mxu0 0
      %925 = vmatprep.subr.bf16.mxu0 0
      %926 = vmatpush1.bf16.msra.mxu0 0
      %927 = vmatprep.subr.bf16.mxu0 0
      %928 = vmatpush1.bf16.msra.mxu0 0
      %929 = vmatprep.subr.bf16.mxu0 0
      %930 = vmatpush1.bf16.msra.mxu0 0
      %931 = vmatprep.subr.bf16.mxu0 0
      %932 = vmatpush1.bf16.msra.mxu0 0
      %933 = vmatprep.mubr.bf16.mxu0 0
      %934 = vmatmul.mubr.bf16.gmra.mrb[0].mxu0 %v899
      %v935 = vpop.f32.mrb[0].mxu0
      %v936 = vadd.f32 %v887, %v935
      %v937 = vpop.f32.mrb[0].mxu0
      %v938 = vpop.f32.mrb[0].mxu0
      %v939 = vpop.f32.mrb[0].mxu0
      %940 = vdwg.mxu0
      %v941 = vld [vmem:[%s6] sm:$0x1]
      %v943 = vlaneseq
      %v944 = vshrl.u32 %v943, 7
      %v945 = vsub.s32 0, %v944
      %v946 = vrot.slane %v941, %v945
      %v948 = vadd.f32 %v936, %v946
      %v949 = vadd.f32 %v948, %v615
      %v950 = vld [vmem:[%s7] sm:$0x1]
      %v951 = vld [vmem:[%s8] sm:$0x1]
      %vm952 = vcmask 261120
      %v953 = vsel %vm952, %v949, 0.0
      %954 = vadd.xlane.f32.xlu0 %v953
      %v955 = vpop.xlane.xlu0 %954
      %v956 = vrcp.pop 32.0
      %v957 = vmul.f32 %v955, %v956
      %v958 = vsub.f32 %v949, %v957
      %v959 = vmul.f32 %v958, %v958
      %v960 = vsel %vm952, %v959, 0.0
      %961 = vadd.xlane.f32.xlu0 %v960
      %v962 = vpop.xlane.xlu0 %961
      %v963 = vmul.f32 %v962, %v956
      %v964 = vadd.f32 %v963, 1e-12
      %v965 = vrsqrt.pop %v964
      %v966 = vmul.f32 %v958, %v965
      %v968 = vlaneseq
      %v969 = vshrl.u32 %v968, 7
      %v970 = vsub.s32 0, %v969
      %v971 = vrot.slane %v950, %v970
      %v973 = vmul.f32 %v966, %v971
      %v975 = vlaneseq
      %v976 = vshrl.u32 %v975, 7
      %v977 = vsub.s32 0, %v976
      %v978 = vrot.slane %v951, %v977
      %v980 = vadd.f32 %v973, %v978
      %v981 = vpack.c.bf16 %v980, %v980
      %v982 = vld [vmem:[%s9] sm:$0xf]
      %v983 = vld [vmem:[%s9 + $0x4] sm:$0xf]
      %v984 = vld [vmem:[%s9 + $0x8] sm:$0xf]
      %v985 = vld [vmem:[%s9 + $0xc] sm:$0xf]
      %v986 = vld [vmem:[%s10] sm:$0x1]
      %v988 = vlaneseq
      %v989 = vshrl.u32 %v988, 7
      %v990 = vsub.s32 0, %v989
      %v991 = vrot.slane %v986, %v990
      %v997 = vunpack.c.l.b16 %v982
      %v998 = vunpack.c.l.b16 %v983
      %v999 = vunpack.c.l.b16 %v984
      %v1000 = vunpack.c.l.b16 %v985
      %v1001 = vpack.c.b16 %v998, %v997
      %v1002 = vpack.c.b16 %v1000, %v999
      %v1006 = vsel %vm952, %v981, 0
      %1008 = vmatprep.subr.bf16.mxu0 0
      %1009 = vmatpush1.bf16.msra.mxu0 %v1001
      %1010 = vmatprep.subr.bf16.mxu0 0
      %1011 = vmatpush1.bf16.msra.mxu0 %v1002
      %1012 = vmatprep.subr.bf16.mxu0 0
      %1013 = vmatpush1.bf16.msra.mxu0 0
      %1014 = vmatprep.subr.bf16.mxu0 0
      %1015 = vmatpush1.bf16.msra.mxu0 0
      %1016 = vmatprep.subr.bf16.mxu0 0
      %1017 = vmatpush1.bf16.msra.mxu0 0
      %1018 = vmatprep.subr.bf16.mxu0 0
      %1019 = vmatpush1.bf16.msra.mxu0 0
      %1020 = vmatprep.subr.bf16.mxu0 0
      %1021 = vmatpush1.bf16.msra.mxu0 0
      %1022 = vmatprep.subr.bf16.mxu0 0
      %1023 = vmatpush1.bf16.msra.mxu0 0
      %1024 = vmatprep.subr.bf16.mxu0 0
      %1025 = vmatpush1.bf16.msra.mxu0 0
      %1026 = vmatprep.subr.bf16.mxu0 0
      %1027 = vmatpush1.bf16.msra.mxu0 0
      %1028 = vmatprep.subr.bf16.mxu0 0
      %1029 = vmatpush1.bf16.msra.mxu0 0
      %1030 = vmatprep.subr.bf16.mxu0 0
      %1031 = vmatpush1.bf16.msra.mxu0 0
      %1032 = vmatprep.subr.bf16.mxu0 0
      %1033 = vmatpush1.bf16.msra.mxu0 0
      %1034 = vmatprep.subr.bf16.mxu0 0
      %1035 = vmatpush1.bf16.msra.mxu0 0
      %1036 = vmatprep.subr.bf16.mxu0 0
      %1037 = vmatpush1.bf16.msra.mxu0 0
      %1038 = vmatprep.subr.bf16.mxu0 0
      %1039 = vmatpush1.bf16.msra.mxu0 0
      %1040 = vmatprep.mubr.bf16.mxu0 0
      %1041 = vmatmul.mubr.bf16.gmra.mrb[0].mxu0 %v1006
      %v1042 = vpop.f32.mrb[0].mxu0
      %v1043 = vadd.f32 %v991, %v1042
      %v1044 = vpop.f32.mrb[0].mxu0
      %v1045 = vpop.f32.mrb[0].mxu0
      %v1046 = vpop.f32.mrb[0].mxu0
      %1047 = vdwg.mxu0
      %v1048 = vmul.f32 %v1043, 0.5
      %v1049 = vmul.f32 %v1043, 0.70710677
      %vm1050 = vcmp.ge.f32.partialorder %v1049, 0.0
      %v1051 = vsel %vm1050, 1.0, -1.0
      %v1052 = vand.u32 2147483647, %v1049
      %v1053 = vmul.f32 %v1052, 0.3275911
      %v1054 = vadd.f32 %v1053, 1.0
      %v1055 = vrcp.pop %v1054
      %v1056 = vmul.f32 %v1055, 1.0614054
      %v1057 = vadd.f32 %v1056, -1.4531521
      %v1058 = vmul.f32 %v1057, %v1055
      %v1059 = vadd.f32 %v1058, 1.4214138
      %v1060 = vmul.f32 %v1059, %v1055
      %v1061 = vadd.f32 %v1060, -0.28449672
      %v1062 = vmul.f32 %v1061, %v1055
      %v1063 = vadd.f32 %v1062, 0.2548296
      %v1064 = vmul.f32 %v1063, %v1055
      %v1065 = vsub.f32 0.0, %v1052
      %v1066 = vmul.f32 %v1065, %v1052
      %v1067 = vmul.f32 %v1066, 1.442695
      %v1068 = vpow.pop %v1067
      %v1069 = vmul.f32 %v1064, %v1068
      %v1070 = vsub.f32 1.0, %v1069
      %v1071 = vmul.f32 %v1051, %v1070
      %v1072 = vadd.f32 %v1071, 1.0
      %v1073 = vmul.f32 %v1048, %v1072
      %v1074 = vpack.c.bf16 %v1073, %v1073
      %v1075 = vld [vmem:[%s11] sm:$0xf]
      %v1076 = vld [vmem:[%s11 + $0x4] sm:$0xf]
      %v1077 = vld [vmem:[%s11 + $0x8] sm:$0xf]
      %v1078 = vld [vmem:[%s11 + $0xc] sm:$0xf]
      %v1079 = vld [vmem:[%s11 + $0x10] sm:$0xf]
      %v1080 = vld [vmem:[%s11 + $0x14] sm:$0xf]
      %v1081 = vld [vmem:[%s11 + $0x18] sm:$0xf]
      %v1082 = vld [vmem:[%s11 + $0x1c] sm:$0xf]
      %v1083 = vld [vmem:[%s12] sm:$0x1]
      %v1085 = vlaneseq
      %v1086 = vshrl.u32 %v1085, 7
      %v1087 = vsub.s32 0, %v1086
      %v1088 = vrot.slane %v1083, %v1087
      %v1098 = vunpack.c.l.b16 %v1075
      %v1099 = vunpack.c.l.b16 %v1076
      %v1100 = vunpack.c.l.b16 %v1077
      %v1101 = vunpack.c.l.b16 %v1078
      %v1102 = vunpack.c.l.b16 %v1079
      %v1103 = vunpack.c.l.b16 %v1080
      %v1104 = vunpack.c.l.b16 %v1081
      %v1105 = vunpack.c.l.b16 %v1082
      %v1106 = vpack.c.b16 %v1099, %v1098
      %v1107 = vpack.c.b16 %v1101, %v1100
      %v1108 = vpack.c.b16 %v1103, %v1102
      %v1109 = vpack.c.b16 %v1105, %v1104
      %vm1114 = vcmask 523264
      %v1116 = vsel %vm1114, %v1074, 0
      %1118 = vmatprep.subr.bf16.mxu0 0
      %1119 = vmatpush1.bf16.msra.mxu0 %v1106
      %1120 = vmatprep.subr.bf16.mxu0 0
      %1121 = vmatpush1.bf16.msra.mxu0 %v1107
      %1122 = vmatprep.subr.bf16.mxu0 0
      %1123 = vmatpush1.bf16.msra.mxu0 %v1108
      %1124 = vmatprep.subr.bf16.mxu0 0
      %1125 = vmatpush1.bf16.msra.mxu0 %v1109
      %1126 = vmatprep.subr.bf16.mxu0 0
      %1127 = vmatpush1.bf16.msra.mxu0 0
      %1128 = vmatprep.subr.bf16.mxu0 0
      %1129 = vmatpush1.bf16.msra.mxu0 0
      %1130 = vmatprep.subr.bf16.mxu0 0
      %1131 = vmatpush1.bf16.msra.mxu0 0
      %1132 = vmatprep.subr.bf16.mxu0 0
      %1133 = vmatpush1.bf16.msra.mxu0 0
      %1134 = vmatprep.subr.bf16.mxu0 0
      %1135 = vmatpush1.bf16.msra.mxu0 0
      %1136 = vmatprep.subr.bf16.mxu0 0
      %1137 = vmatpush1.bf16.msra.mxu0 0
      %1138 = vmatprep.subr.bf16.mxu0 0
      %1139 = vmatpush1.bf16.msra.mxu0 0
      %1140 = vmatprep.subr.bf16.mxu0 0
      %1141 = vmatpush1.bf16.msra.mxu0 0
      %1142 = vmatprep.subr.bf16.mxu0 0
      %1143 = vmatpush1.bf16.msra.mxu0 0
      %1144 = vmatprep.subr.bf16.mxu0 0
      %1145 = vmatpush1.bf16.msra.mxu0 0
      %1146 = vmatprep.subr.bf16.mxu0 0
      %1147 = vmatpush1.bf16.msra.mxu0 0
      %1148 = vmatprep.subr.bf16.mxu0 0
      %1149 = vmatpush1.bf16.msra.mxu0 0
      %1150 = vmatprep.mubr.bf16.mxu0 0
      %1151 = vmatmul.mubr.bf16.gmra.mrb[0].mxu0 %v1116
      %v1152 = vpop.f32.mrb[0].mxu0
      %v1153 = vadd.f32 %v1088, %v1152
      %v1154 = vpop.f32.mrb[0].mxu0
      %v1155 = vpop.f32.mrb[0].mxu0
      %v1156 = vpop.f32.mrb[0].mxu0
      %1157 = vdwg.mxu0
      %v1158 = vadd.f32 %v1153, %v980
      %v1159 = vld [vmem:[%s13] sm:$0x1]
      %v1160 = vld [vmem:[%s14] sm:$0x1]
      %v1161 = vsel %vm952, %v1158, 0.0
      %1162 = vadd.xlane.f32.xlu0 %v1161
      %v1163 = vpop.xlane.xlu0 %1162
      %v1164 = vmul.f32 %v1163, %v956
      %v1165 = vsub.f32 %v1158, %v1164
      %v1166 = vmul.f32 %v1165, %v1165
      %v1167 = vsel %vm952, %v1166, 0.0
      %1168 = vadd.xlane.f32.xlu0 %v1167
      %v1169 = vpop.xlane.xlu0 %1168
      %v1170 = vmul.f32 %v1169, %v956
      %v1171 = vadd.f32 %v1170, 1e-12
      %v1172 = vrsqrt.pop %v1171
      %v1173 = vmul.f32 %v1165, %v1172
      %v1175 = vlaneseq
      %v1176 = vshrl.u32 %v1175, 7
      %v1177 = vsub.s32 0, %v1176
      %v1178 = vrot.slane %v1159, %v1177
      %v1180 = vmul.f32 %v1173, %v1178
      %v1182 = vlaneseq
      %v1183 = vshrl.u32 %v1182, 7
      %v1184 = vsub.s32 0, %v1183
      %v1185 = vrot.slane %v1160, %v1184
      %v1187 = vadd.f32 %v1180, %v1185
      %v1188 = vpack.c.bf16 %v1187, %v1187
      %vm1189 = vcmask 257024
      %1190 = vst.msk [vmem:[%s605] sm:$0xf] %vm1189, %v1188
      %p1191 = scmp.lt.s32.totalorder %s30, 1
      %s1192 = scalar_select %p1191, %s30, 1
      %p1193 = scmp.lt.s32.totalorder %s31, 0
      %s1194 = scalar_select %p1193, %s31, 0
      %s1195 = sadd.s32 %s1194, %s1192
      %s1196 = smul.addr %s1195, 4
      %s1197 = scalar_lea.vmem %s15, %s1196
      // Predicated region
      $region81: #{lemma_bert_forward.8} parent=79 // pred_check
        %p1198 = pneg %p402
      $region82: #{lemma_bert_forward.8} parent=79 // pred_check_branch
        %1200 = sbr.rel (%p1198) target = $region84
      $region83: #{lemma_bert_forward.8} parent=79 // pred_region
        _
      $region84: #{lemma_bert_forward.8} parent=79 // pred_fallthru
        _
    $region80: #{lemma_bert_forward.8} parent=5 // pred_fallthru
      _
    %p1201 = scmp.le.s32.totalorder 2, %s21
    // Predicated region
    $region85: #{lemma_bert_forward.8} parent=5 // pred_check
      %p1202 = pneg %p1201
    $region86: #{lemma_bert_forward.8} parent=5 // pred_check_branch
      %1204 = sbr.rel (%p1202) target = $region88
    $region87: #{lemma_bert_forward.8} parent=5 // pred_region
      %s1205 = ssub.s32 %s21, 2
      // Predicated region
      $region89: #{lemma_bert_forward.8} parent=87 // pred_check
        %p1206 = pneg %p408
      $region90: #{lemma_bert_forward.8} parent=87 // pred_check_branch
        %1208 = sbr.rel (%p1206) target = $region92
      $region91: #{lemma_bert_forward.8} parent=87 // pred_region
        %p1209 = scmp.lt.s32.totalorder %s32, 1
        %s1210 = scalar_select %p1209, %s32, 1
        %p1211 = scmp.lt.s32.totalorder %s33, 0
        %s1212 = scalar_select %p1211, %s33, 0
        %s1213 = sadd.s32 %s1212, %s1210
        %s1214 = smul.addr %s1213, 4
        %s1215 = scalar_lea.vmem %s15, %s1214
      $region92: #{lemma_bert_forward.8} parent=87 // pred_fallthru
        _
    $region88: #{lemma_bert_forward.8} parent=5 // pred_fallthru
      _
  $region6: #{lemma_bert_forward.8} parent=0 // loop_footer
    %s25 = sadd.s32 1, %s21
  $region7: #{lemma_bert_forward.8} parent=0 // loop_footer_branch
    %20 = sbr.rel target = $region3
  $region8: #{lemma_bert_forward.8} parent=0 // loop_exit
    _

</llo_original>
